<compile_context>
chip_gen: v7x
topology: tpu7x:2x2x1
jax: 0.10.0
libtpu: 0.0.40
codegen_flags: <defaults>
</compile_context>

<pallas_src>
import math

import jax
import jax.numpy as jnp
from jax import lax
from jax.experimental import pallas as pl
from jax.experimental.pallas import tpu as pltpu

LN_EPS = 1e-5       # nn.LayerNorm default
NEG_SLOPE = 0.01    # nn.LeakyReLU default negative_slope


# ----------------------------- Pallas kernel ------------------------------- #

def _fine_mapper_kernel(x_ref,
                        w1_ref, b1_ref, g1_ref, e1_ref,
                        w2_ref, b2_ref, g2_ref, e2_ref,
                        w3_ref, b3_ref, g3_ref, e3_ref,
                        w4_ref, b4_ref,
                        o_ref):
    """One grid step == the full MLP of one word applied to its [B, Din] slice."""

    def lin_ln_lrelu(h_f32, w_ref, b_ref, g_ref, e_ref):
        # bf16 MXU matmul with f32 accumulation; LN + LeakyReLU in f32 on the VPU.
        y = jnp.dot(h_f32.astype(jnp.bfloat16), w_ref[0],
                    preferred_element_type=jnp.float32)
        y = y + b_ref[0]
        mu = jnp.mean(y, axis=-1, keepdims=True)
        var = jnp.mean((y - mu) ** 2, axis=-1, keepdims=True)   # biased, like PyTorch
        y = (y - mu) * lax.rsqrt(var + LN_EPS)
        y = y * g_ref[0] + e_ref[0]
        return jnp.where(y >= 0.0, y, NEG_SLOPE * y)            # LeakyReLU

    h = x_ref[0].astype(jnp.float32)                            # [B, Din]
    h = lin_ln_lrelu(h, w1_ref, b1_ref, g1_ref, e1_ref)
    h = lin_ln_lrelu(h, w2_ref, b2_ref, g2_ref, e2_ref)
    h = lin_ln_lrelu(h, w3_ref, b3_ref, g3_ref, e3_ref)
    out = jnp.dot(h.astype(jnp.bfloat16), w4_ref[0],
                  preferred_element_type=jnp.float32) + b4_ref[0]
    o_ref[0] = out.astype(o_ref.dtype)                          # [B, Dout]


# ----------------------------- Kernel wrapper ------------------------------- #

def fine_mapper_forward(embs, params):
    """embs: [B, num_words, input_dim] -> [B, num_words, output_dim]."""
    B, W, Din = embs.shape
    H = params["w1"].shape[-1]
    Dout = params["w4"].shape[-1]

    # Word axis leading so each grid step grabs a full (B, Din) slab (lane-dense).
    xw = jnp.transpose(embs, (1, 0, 2))                         # [W, B, Din]

    idx = lambda i: (i, 0, 0)
    spec = lambda s: pl.BlockSpec(s, idx)

    out = pl.pallas_call(
        _fine_mapper_kernel,
        out_shape=jax.ShapeDtypeStruct((W, B, Dout), embs.dtype),
        grid=(W,),
        in_specs=[
            spec((1, B, Din)),
            spec((1, Din, H)),  spec((1, 1, H)), spec((1, 1, H)), spec((1, 1, H)),
            spec((1, H, H)),    spec((1, 1, H)), spec((1, 1, H)), spec((1, 1, H)),
            spec((1, H, H)),    spec((1, 1, H)), spec((1, 1, H)), spec((1, 1, H)),
            spec((1, H, Dout)), spec((1, 1, Dout)),
        ],
        out_specs=spec((1, B, Dout)),
        compiler_params=pltpu.CompilerParams(
            dimension_semantics=("parallel",),          # megacore / 2-TC split on v7x
            vmem_limit_bytes=48 * 1024 * 1024,          # fits real 1280-wide bf16 weights, < v7x 64 MiB
        ),
    )(xw,
      params["w1"], params["b1"], params["ln1_g"], params["ln1_b"],
      params["w2"], params["b2"], params["ln2_g"], params["ln2_b"],
      params["w3"], params["b3"], params["ln3_g"], params["ln3_b"],
      params["w4"], params["b4"])

    return jnp.transpose(out, (1, 0, 2))                        # [B, W, Dout]
    # TODO(synk): for very large batch, add a second ('parallel') grid axis tiling B.


# ------------------------------ Param init ---------------------------------- #

def init_params(key, *, input_dim, hidden_dim, output_dim, num_words):
    ks = iter(jax.random.split(key, 64))

    def u(shape, fan_in):
        bound = 1.0 / math.sqrt(fan_in)
        return jax.random.uniform(next(ks), shape, jnp.float32, -bound, bound)

    W, H = num_words, hidden_dim
    return dict(
        # Weights stored (in, out) == PyTorch W.T; cast ONCE to bf16 for the MXU.
        w1=u((W, input_dim, H), input_dim).astype(jnp.bfloat16),
        b1=u((W, 1, H), input_dim),
        ln1_g=jnp.ones((W, 1, H), jnp.float32), ln1_b=jnp.zeros((W, 1, H), jnp.float32),
        w2=u((W, H, H), H).astype(jnp.bfloat16),
        b2=u((W, 1, H), H),
        ln2_g=jnp.ones((W, 1, H), jnp.float32), ln2_b=jnp.zeros((W, 1, H), jnp.float32),
        w3=u((W, H, H), H).astype(jnp.bfloat16),
        b3=u((W, 1, H), H),
        ln3_g=jnp.ones((W, 1, H), jnp.float32), ln3_b=jnp.zeros((W, 1, H), jnp.float32),
        w4=u((W, H, output_dim), H).astype(jnp.bfloat16),
        b4=u((W, 1, output_dim), H),
    )


# --------------------------- Pure-JAX reference ------------------------------ #

def reference_forward(embs, params):
    """Mirrors the kernel's dtype strategy (bf16 matmuls, f32 elementwise)."""
    x = jnp.transpose(embs, (1, 0, 2)).astype(jnp.float32)      # [W, B, Din]

    def blk(h, w, b, g, e):
        y = jnp.einsum("wbd,wdh->wbh", h.astype(jnp.bfloat16), w,
                       preferred_element_type=jnp.float32) + b
        mu = jnp.mean(y, axis=-1, keepdims=True)
        var = jnp.mean((y - mu) ** 2, axis=-1, keepdims=True)
        y = (y - mu) * lax.rsqrt(var + LN_EPS) * g + e
        return jnp.where(y >= 0.0, y, NEG_SLOPE * y)

    h = blk(x, params["w1"], params["b1"], params["ln1_g"], params["ln1_b"])
    h = blk(h, params["w2"], params["b2"], params["ln2_g"], params["ln2_b"])
    h = blk(h, params["w3"], params["b3"], params["ln3_g"], params["ln3_b"])
    out = jnp.einsum("wbh,who->wbo", h.astype(jnp.bfloat16), params["w4"],
                     preferred_element_type=jnp.float32) + params["b4"]
    return jnp.transpose(out, (1, 0, 2)).astype(embs.dtype)


# ---------------------------------- Main ------------------------------------ #

if __name__ == "__main__":
    # Small shapes consistent with the module (real config uses hidden=1280,
    # e.g. input_dim=768/1024, output_dim=1024, num_words ~ 8-20).
    B, NUM_WORDS = 4, 8
    INPUT_DIM, HIDDEN_DIM, OUTPUT_DIM = 64, 128, 64

    key = jax.random.PRNGKey(0)
    k_params, k_x = jax.random.split(key)
    params = init_params(k_params, input_dim=INPUT_DIM, hidden_dim=HIDDEN_DIM,
                         output_dim=OUTPUT_DIM, num_words=NUM_WORDS)
    embs = jax.random.normal(k_x, (B, NUM_WORDS, INPUT_DIM), dtype=jnp.float32)

    out = jax.block_until_ready(fine_mapper_forward(embs, params))
    assert out.shape == (B, NUM_WORDS, OUTPUT_DIM), out.shape
    assert bool(jnp.all(jnp.isfinite(out)))

    ref = jax.block_until_ready(reference_forward(embs, params))
    max_err = float(jnp.max(jnp.abs(out - ref)))
    assert max_err < 2e-2, f"max abs error vs reference: {max_err}"

    print("KERNEL_OK")
</pallas_src>

<mosaic_0001>
module attributes {stable_mosaic.version = 11 : i64} {
  func.func @_fine_mapper_kernel(%arg0: i32, %arg1: memref<1x4x64xf32, #tpu.memory_space<vmem>>, %arg2: memref<1x64x128xbf16, #tpu.memory_space<vmem>>, %arg3: memref<1x1x128xf32, #tpu.memory_space<vmem>>, %arg4: memref<1x1x128xf32, #tpu.memory_space<vmem>>, %arg5: memref<1x1x128xf32, #tpu.memory_space<vmem>>, %arg6: memref<1x128x128xbf16, #tpu.memory_space<vmem>>, %arg7: memref<1x1x128xf32, #tpu.memory_space<vmem>>, %arg8: memref<1x1x128xf32, #tpu.memory_space<vmem>>, %arg9: memref<1x1x128xf32, #tpu.memory_space<vmem>>, %arg10: memref<1x128x128xbf16, #tpu.memory_space<vmem>>, %arg11: memref<1x1x128xf32, #tpu.memory_space<vmem>>, %arg12: memref<1x1x128xf32, #tpu.memory_space<vmem>>, %arg13: memref<1x1x128xf32, #tpu.memory_space<vmem>>, %arg14: memref<1x128x64xbf16, #tpu.memory_space<vmem>>, %arg15: memref<1x1x64xf32, #tpu.memory_space<vmem>>, %arg16: memref<1x4x64xf32, #tpu.memory_space<vmem>>) attributes {dimension_semantics = [#tpu.dimension_semantics<parallel>], iteration_bounds = array<i64: 8>, scalar_prefetch = 0 : i64, scratch_operands = 0 : i64, tpu.core_type = #tpu.core_type<tc>, window_params = [{transform_indices = @transform_0, window_bounds = array<i64: 1, 4, 64>}, {transform_indices = @transform_1, window_bounds = array<i64: 1, 64, 128>}, {transform_indices = @transform_2, window_bounds = array<i64: 1, 1, 128>}, {transform_indices = @transform_3, window_bounds = array<i64: 1, 1, 128>}, {transform_indices = @transform_4, window_bounds = array<i64: 1, 1, 128>}, {transform_indices = @transform_5, window_bounds = array<i64: 1, 128, 128>}, {transform_indices = @transform_6, window_bounds = array<i64: 1, 1, 128>}, {transform_indices = @transform_7, window_bounds = array<i64: 1, 1, 128>}, {transform_indices = @transform_8, window_bounds = array<i64: 1, 1, 128>}, {transform_indices = @transform_9, window_bounds = array<i64: 1, 128, 128>}, {transform_indices = @transform_10, window_bounds = array<i64: 1, 1, 128>}, {transform_indices = @transform_11, window_bounds = array<i64: 1, 1, 128>}, {transform_indices = @transform_12, window_bounds = array<i64: 1, 1, 128>}, {transform_indices = @transform_13, window_bounds = array<i64: 1, 128, 64>}, {transform_indices = @transform_14, window_bounds = array<i64: 1, 1, 64>}, {transform_indices = @transform_15, window_bounds = array<i64: 1, 4, 64>}]} {
    %c0 = arith.constant 0 : index
    %c0_0 = arith.constant 0 : index
    %c0_1 = arith.constant 0 : index
    %0 = vector.load %arg1[%c0, %c0_0, %c0_1] : memref<1x4x64xf32, #tpu.memory_space<vmem>>, vector<1x4x64xf32>
    %1 = vector.shape_cast %0 : vector<1x4x64xf32> to vector<4x64xf32>
    %2 = arith.truncf %1 : vector<4x64xf32> to vector<4x64xbf16>
    %c0_2 = arith.constant 0 : index
    %c0_3 = arith.constant 0 : index
    %c0_4 = arith.constant 0 : index
    %3 = vector.load %arg2[%c0_2, %c0_3, %c0_4] : memref<1x64x128xbf16, #tpu.memory_space<vmem>>, vector<1x64x128xbf16>
    %4 = vector.shape_cast %3 : vector<1x64x128xbf16> to vector<64x128xbf16>
    %cst = arith.constant dense<0.000000e+00> : vector<4x128xf32>
    %5 = tpu.matmul %2, %4, %cst {dimension_numbers = #tpu.dot_dimension_numbers<[1], [0], [0], [1], [0, 0, 1, 1], [], []>} : vector<4x64xbf16>, vector<64x128xbf16>, vector<4x128xf32> -> vector<4x128xf32>
    %c0_5 = arith.constant 0 : index
    %c0_6 = arith.constant 0 : index
    %c0_7 = arith.constant 0 : index
    %6 = vector.load %arg3[%c0_5, %c0_6, %c0_7] : memref<1x1x128xf32, #tpu.memory_space<vmem>>, vector<1x1x128xf32>
    %7 = vector.shape_cast %6 : vector<1x1x128xf32> to vector<1x128xf32>
    %8 = vector.broadcast %7 : vector<1x128xf32> to vector<4x128xf32>
    %9 = arith.addf %5, %8 : vector<4x128xf32>
    %cst_8 = arith.constant dense<0.000000e+00> : vector<4xf32>
    %10 = vector.multi_reduction <add>, %9, %cst_8 [1] : vector<4x128xf32> to vector<4xf32>
    %11 = vector.shape_cast %10 : vector<4xf32> to vector<4x1xf32>
    %cst_9 = arith.constant 1.280000e+02 : f32
    %12 = vector.broadcast %cst_9 : f32 to vector<4x1xf32>
    %13 = arith.divf %11, %12 : vector<4x1xf32>
    %14 = vector.broadcast %13 : vector<4x1xf32> to vector<4x128xf32>
    %15 = arith.subf %9, %14 : vector<4x128xf32>
    %16 = arith.mulf %15, %15 : vector<4x128xf32>
    %cst_10 = arith.constant dense<0.000000e+00> : vector<4xf32>
    %17 = vector.multi_reduction <add>, %16, %cst_10 [1] : vector<4x128xf32> to vector<4xf32>
    %18 = vector.shape_cast %17 : vector<4xf32> to vector<4x1xf32>
    %cst_11 = arith.constant 1.280000e+02 : f32
    %19 = vector.broadcast %cst_11 : f32 to vector<4x1xf32>
    %20 = arith.divf %18, %19 : vector<4x1xf32>
    %21 = vector.broadcast %13 : vector<4x1xf32> to vector<4x128xf32>
    %22 = arith.subf %9, %21 : vector<4x128xf32>
    %cst_12 = arith.constant 9.99999974E-6 : f32
    %23 = vector.broadcast %cst_12 : f32 to vector<4x1xf32>
    %24 = arith.addf %20, %23 : vector<4x1xf32>
    %25 = math.rsqrt %24 : vector<4x1xf32>
    %26 = vector.broadcast %25 : vector<4x1xf32> to vector<4x128xf32>
    %27 = arith.mulf %22, %26 : vector<4x128xf32>
    %c0_13 = arith.constant 0 : index
    %c0_14 = arith.constant 0 : index
    %c0_15 = arith.constant 0 : index
    %28 = vector.load %arg4[%c0_13, %c0_14, %c0_15] : memref<1x1x128xf32, #tpu.memory_space<vmem>>, vector<1x1x128xf32>
    %29 = vector.shape_cast %28 : vector<1x1x128xf32> to vector<1x128xf32>
    %30 = vector.broadcast %29 : vector<1x128xf32> to vector<4x128xf32>
    %31 = arith.mulf %27, %30 : vector<4x128xf32>
    %c0_16 = arith.constant 0 : index
    %c0_17 = arith.constant 0 : index
    %c0_18 = arith.constant 0 : index
    %32 = vector.load %arg5[%c0_16, %c0_17, %c0_18] : memref<1x1x128xf32, #tpu.memory_space<vmem>>, vector<1x1x128xf32>
    %33 = vector.shape_cast %32 : vector<1x1x128xf32> to vector<1x128xf32>
    %34 = vector.broadcast %33 : vector<1x128xf32> to vector<4x128xf32>
    %35 = arith.addf %31, %34 : vector<4x128xf32>
    %cst_19 = arith.constant 0.000000e+00 : f32
    %36 = vector.broadcast %cst_19 : f32 to vector<4x128xf32>
    %37 = arith.cmpf oge, %35, %36 : vector<4x128xf32>
    %cst_20 = arith.constant 0.00999999977 : f32
    %38 = vector.broadcast %cst_20 : f32 to vector<4x128xf32>
    %39 = arith.mulf %38, %35 : vector<4x128xf32>
    %40 = arith.select %37, %35, %39 : vector<4x128xi1>, vector<4x128xf32>
    %41 = arith.truncf %40 : vector<4x128xf32> to vector<4x128xbf16>
    %c0_21 = arith.constant 0 : index
    %c0_22 = arith.constant 0 : index
    %c0_23 = arith.constant 0 : index
    %42 = vector.load %arg6[%c0_21, %c0_22, %c0_23] : memref<1x128x128xbf16, #tpu.memory_space<vmem>>, vector<1x128x128xbf16>
    %43 = vector.shape_cast %42 : vector<1x128x128xbf16> to vector<128x128xbf16>
    %cst_24 = arith.constant dense<0.000000e+00> : vector<4x128xf32>
    %44 = tpu.matmul %41, %43, %cst_24 {dimension_numbers = #tpu.dot_dimension_numbers<[1], [0], [0], [1], [0, 0, 1, 1], [], []>} : vector<4x128xbf16>, vector<128x128xbf16>, vector<4x128xf32> -> vector<4x128xf32>
    %c0_25 = arith.constant 0 : index
    %c0_26 = arith.constant 0 : index
    %c0_27 = arith.constant 0 : index
    %45 = vector.load %arg7[%c0_25, %c0_26, %c0_27] : memref<1x1x128xf32, #tpu.memory_space<vmem>>, vector<1x1x128xf32>
    %46 = vector.shape_cast %45 : vector<1x1x128xf32> to vector<1x128xf32>
    %47 = vector.broadcast %46 : vector<1x128xf32> to vector<4x128xf32>
    %48 = arith.addf %44, %47 : vector<4x128xf32>
    %cst_28 = arith.constant dense<0.000000e+00> : vector<4xf32>
    %49 = vector.multi_reduction <add>, %48, %cst_28 [1] : vector<4x128xf32> to vector<4xf32>
    %50 = vector.shape_cast %49 : vector<4xf32> to vector<4x1xf32>
    %cst_29 = arith.constant 1.280000e+02 : f32
    %51 = vector.broadcast %cst_29 : f32 to vector<4x1xf32>
    %52 = arith.divf %50, %51 : vector<4x1xf32>
    %53 = vector.broadcast %52 : vector<4x1xf32> to vector<4x128xf32>
    %54 = arith.subf %48, %53 : vector<4x128xf32>
    %55 = arith.mulf %54, %54 : vector<4x128xf32>
    %cst_30 = arith.constant dense<0.000000e+00> : vector<4xf32>
    %56 = vector.multi_reduction <add>, %55, %cst_30 [1] : vector<4x128xf32> to vector<4xf32>
    %57 = vector.shape_cast %56 : vector<4xf32> to vector<4x1xf32>
    %cst_31 = arith.constant 1.280000e+02 : f32
    %58 = vector.broadcast %cst_31 : f32 to vector<4x1xf32>
    %59 = arith.divf %57, %58 : vector<4x1xf32>
    %60 = vector.broadcast %52 : vector<4x1xf32> to vector<4x128xf32>
    %61 = arith.subf %48, %60 : vector<4x128xf32>
    %cst_32 = arith.constant 9.99999974E-6 : f32
    %62 = vector.broadcast %cst_32 : f32 to vector<4x1xf32>
    %63 = arith.addf %59, %62 : vector<4x1xf32>
    %64 = math.rsqrt %63 : vector<4x1xf32>
    %65 = vector.broadcast %64 : vector<4x1xf32> to vector<4x128xf32>
    %66 = arith.mulf %61, %65 : vector<4x128xf32>
    %c0_33 = arith.constant 0 : index
    %c0_34 = arith.constant 0 : index
    %c0_35 = arith.constant 0 : index
    %67 = vector.load %arg8[%c0_33, %c0_34, %c0_35] : memref<1x1x128xf32, #tpu.memory_space<vmem>>, vector<1x1x128xf32>
    %68 = vector.shape_cast %67 : vector<1x1x128xf32> to vector<1x128xf32>
    %69 = vector.broadcast %68 : vector<1x128xf32> to vector<4x128xf32>
    %70 = arith.mulf %66, %69 : vector<4x128xf32>
    %c0_36 = arith.constant 0 : index
    %c0_37 = arith.constant 0 : index
    %c0_38 = arith.constant 0 : index
    %71 = vector.load %arg9[%c0_36, %c0_37, %c0_38] : memref<1x1x128xf32, #tpu.memory_space<vmem>>, vector<1x1x128xf32>
    %72 = vector.shape_cast %71 : vector<1x1x128xf32> to vector<1x128xf32>
    %73 = vector.broadcast %72 : vector<1x128xf32> to vector<4x128xf32>
    %74 = arith.addf %70, %73 : vector<4x128xf32>
    %cst_39 = arith.constant 0.000000e+00 : f32
    %75 = vector.broadcast %cst_39 : f32 to vector<4x128xf32>
    %76 = arith.cmpf oge, %74, %75 : vector<4x128xf32>
    %cst_40 = arith.constant 0.00999999977 : f32
    %77 = vector.broadcast %cst_40 : f32 to vector<4x128xf32>
    %78 = arith.mulf %77, %74 : vector<4x128xf32>
    %79 = arith.select %76, %74, %78 : vector<4x128xi1>, vector<4x128xf32>
    %80 = arith.truncf %79 : vector<4x128xf32> to vector<4x128xbf16>
    %c0_41 = arith.constant 0 : index
    %c0_42 = arith.constant 0 : index
    %c0_43 = arith.constant 0 : index
    %81 = vector.load %arg10[%c0_41, %c0_42, %c0_43] : memref<1x128x128xbf16, #tpu.memory_space<vmem>>, vector<1x128x128xbf16>
    %82 = vector.shape_cast %81 : vector<1x128x128xbf16> to vector<128x128xbf16>
    %cst_44 = arith.constant dense<0.000000e+00> : vector<4x128xf32>
    %83 = tpu.matmul %80, %82, %cst_44 {dimension_numbers = #tpu.dot_dimension_numbers<[1], [0], [0], [1], [0, 0, 1, 1], [], []>} : vector<4x128xbf16>, vector<128x128xbf16>, vector<4x128xf32> -> vector<4x128xf32>
    %c0_45 = arith.constant 0 : index
    %c0_46 = arith.constant 0 : index
    %c0_47 = arith.constant 0 : index
    %84 = vector.load %arg11[%c0_45, %c0_46, %c0_47] : memref<1x1x128xf32, #tpu.memory_space<vmem>>, vector<1x1x128xf32>
    %85 = vector.shape_cast %84 : vector<1x1x128xf32> to vector<1x128xf32>
    %86 = vector.broadcast %85 : vector<1x128xf32> to vector<4x128xf32>
    %87 = arith.addf %83, %86 : vector<4x128xf32>
    %cst_48 = arith.constant dense<0.000000e+00> : vector<4xf32>
    %88 = vector.multi_reduction <add>, %87, %cst_48 [1] : vector<4x128xf32> to vector<4xf32>
    %89 = vector.shape_cast %88 : vector<4xf32> to vector<4x1xf32>
    %cst_49 = arith.constant 1.280000e+02 : f32
    %90 = vector.broadcast %cst_49 : f32 to vector<4x1xf32>
    %91 = arith.divf %89, %90 : vector<4x1xf32>
    %92 = vector.broadcast %91 : vector<4x1xf32> to vector<4x128xf32>
    %93 = arith.subf %87, %92 : vector<4x128xf32>
    %94 = arith.mulf %93, %93 : vector<4x128xf32>
    %cst_50 = arith.constant dense<0.000000e+00> : vector<4xf32>
    %95 = vector.multi_reduction <add>, %94, %cst_50 [1] : vector<4x128xf32> to vector<4xf32>
    %96 = vector.shape_cast %95 : vector<4xf32> to vector<4x1xf32>
    %cst_51 = arith.constant 1.280000e+02 : f32
    %97 = vector.broadcast %cst_51 : f32 to vector<4x1xf32>
    %98 = arith.divf %96, %97 : vector<4x1xf32>
    %99 = vector.broadcast %91 : vector<4x1xf32> to vector<4x128xf32>
    %100 = arith.subf %87, %99 : vector<4x128xf32>
    %cst_52 = arith.constant 9.99999974E-6 : f32
    %101 = vector.broadcast %cst_52 : f32 to vector<4x1xf32>
    %102 = arith.addf %98, %101 : vector<4x1xf32>
    %103 = math.rsqrt %102 : vector<4x1xf32>
    %104 = vector.broadcast %103 : vector<4x1xf32> to vector<4x128xf32>
    %105 = arith.mulf %100, %104 : vector<4x128xf32>
    %c0_53 = arith.constant 0 : index
    %c0_54 = arith.constant 0 : index
    %c0_55 = arith.constant 0 : index
    %106 = vector.load %arg12[%c0_53, %c0_54, %c0_55] : memref<1x1x128xf32, #tpu.memory_space<vmem>>, vector<1x1x128xf32>
    %107 = vector.shape_cast %106 : vector<1x1x128xf32> to vector<1x128xf32>
    %108 = vector.broadcast %107 : vector<1x128xf32> to vector<4x128xf32>
    %109 = arith.mulf %105, %108 : vector<4x128xf32>
    %c0_56 = arith.constant 0 : index
    %c0_57 = arith.constant 0 : index
    %c0_58 = arith.constant 0 : index
    %110 = vector.load %arg13[%c0_56, %c0_57, %c0_58] : memref<1x1x128xf32, #tpu.memory_space<vmem>>, vector<1x1x128xf32>
    %111 = vector.shape_cast %110 : vector<1x1x128xf32> to vector<1x128xf32>
    %112 = vector.broadcast %111 : vector<1x128xf32> to vector<4x128xf32>
    %113 = arith.addf %109, %112 : vector<4x128xf32>
    %cst_59 = arith.constant 0.000000e+00 : f32
    %114 = vector.broadcast %cst_59 : f32 to vector<4x128xf32>
    %115 = arith.cmpf oge, %113, %114 : vector<4x128xf32>
    %cst_60 = arith.constant 0.00999999977 : f32
    %116 = vector.broadcast %cst_60 : f32 to vector<4x128xf32>
    %117 = arith.mulf %116, %113 : vector<4x128xf32>
    %118 = arith.select %115, %113, %117 : vector<4x128xi1>, vector<4x128xf32>
    %119 = arith.truncf %118 : vector<4x128xf32> to vector<4x128xbf16>
    %c0_61 = arith.constant 0 : index
    %c0_62 = arith.constant 0 : index
    %c0_63 = arith.constant 0 : index
    %120 = vector.load %arg14[%c0_61, %c0_62, %c0_63] : memref<1x128x64xbf16, #tpu.memory_space<vmem>>, vector<1x128x64xbf16>
    %121 = vector.shape_cast %120 : vector<1x128x64xbf16> to vector<128x64xbf16>
    %cst_64 = arith.constant dense<0.000000e+00> : vector<4x64xf32>
    %122 = tpu.matmul %119, %121, %cst_64 {dimension_numbers = #tpu.dot_dimension_numbers<[1], [0], [0], [1], [0, 0, 1, 1], [], []>} : vector<4x128xbf16>, vector<128x64xbf16>, vector<4x64xf32> -> vector<4x64xf32>
    %c0_65 = arith.constant 0 : index
    %c0_66 = arith.constant 0 : index
    %c0_67 = arith.constant 0 : index
    %123 = vector.load %arg15[%c0_65, %c0_66, %c0_67] : memref<1x1x64xf32, #tpu.memory_space<vmem>>, vector<1x1x64xf32>
    %124 = vector.shape_cast %123 : vector<1x1x64xf32> to vector<1x64xf32>
    %125 = vector.broadcast %124 : vector<1x64xf32> to vector<4x64xf32>
    %126 = arith.addf %122, %125 : vector<4x64xf32>
    %c0_68 = arith.constant 0 : index
    %c0_69 = arith.constant 0 : index
    %c0_70 = arith.constant 0 : index
    %127 = vector.load %arg16[%c0_68, %c0_69, %c0_70] : memref<1x4x64xf32, #tpu.memory_space<vmem>>, vector<1x4x64xf32>
    %128 = vector.shape_cast %127 : vector<1x4x64xf32> to vector<4x64xf32>
    %129 = vector.shape_cast %126 : vector<4x64xf32> to vector<1x4x64xf32>
    tpu.vector_store %arg16[%c0_68, %c0_69, %c0_70], %129 {strides = array<i32>} : memref<1x4x64xf32, #tpu.memory_space<vmem>>, vector<1x4x64xf32>,
    return
  }
  func.func @transform_0(%arg0: i32) -> (i32, i32, i32) {
    %c0_i32 = arith.constant 0 : i32
    %c0_i32_0 = arith.constant 0 : i32
    %c0_i32_1 = arith.constant 0 : i32
    return %arg0, %c0_i32, %c0_i32_0 : i32, i32, i32
  }
  func.func @transform_1(%arg0: i32) -> (i32, i32, i32) {
    %c0_i32 = arith.constant 0 : i32
    %c0_i32_0 = arith.constant 0 : i32
    %c0_i32_1 = arith.constant 0 : i32
    return %arg0, %c0_i32, %c0_i32_0 : i32, i32, i32
  }
  func.func @transform_2(%arg0: i32) -> (i32, i32, i32) {
    %c0_i32 = arith.constant 0 : i32
    %c0_i32_0 = arith.constant 0 : i32
    %c0_i32_1 = arith.constant 0 : i32
    return %arg0, %c0_i32, %c0_i32_0 : i32, i32, i32
  }
  func.func @transform_3(%arg0: i32) -> (i32, i32, i32) {
    %c0_i32 = arith.constant 0 : i32
    %c0_i32_0 = arith.constant 0 : i32
    %c0_i32_1 = arith.constant 0 : i32
    return %arg0, %c0_i32, %c0_i32_0 : i32, i32, i32
  }
  func.func @transform_4(%arg0: i32) -> (i32, i32, i32) {
    %c0_i32 = arith.constant 0 : i32
    %c0_i32_0 = arith.constant 0 : i32
    %c0_i32_1 = arith.constant 0 : i32
    return %arg0, %c0_i32, %c0_i32_0 : i32, i32, i32
  }
  func.func @transform_5(%arg0: i32) -> (i32, i32, i32) {
    %c0_i32 = arith.constant 0 : i32
    %c0_i32_0 = arith.constant 0 : i32
    %c0_i32_1 = arith.constant 0 : i32
    return %arg0, %c0_i32, %c0_i32_0 : i32, i32, i32
  }
  func.func @transform_6(%arg0: i32) -> (i32, i32, i32) {
    %c0_i32 = arith.constant 0 : i32
    %c0_i32_0 = arith.constant 0 : i32
    %c0_i32_1 = arith.constant 0 : i32
    return %arg0, %c0_i32, %c0_i32_0 : i32, i32, i32
  }
  func.func @transform_7(%arg0: i32) -> (i32, i32, i32) {
    %c0_i32 = arith.constant 0 : i32
    %c0_i32_0 = arith.constant 0 : i32
    %c0_i32_1 = arith.constant 0 : i32
    return %arg0, %c0_i32, %c0_i32_0 : i32, i32, i32
  }
  func.func @transform_8(%arg0: i32) -> (i32, i32, i32) {
    %c0_i32 = arith.constant 0 : i32
    %c0_i32_0 = arith.constant 0 : i32
    %c0_i32_1 = arith.constant 0 : i32
    return %arg0, %c0_i32, %c0_i32_0 : i32, i32, i32
  }
  func.func @transform_9(%arg0: i32) -> (i32, i32, i32) {
    %c0_i32 = arith.constant 0 : i32
    %c0_i32_0 = arith.constant 0 : i32
    %c0_i32_1 = arith.constant 0 : i32
    return %arg0, %c0_i32, %c0_i32_0 : i32, i32, i32
  }
  func.func @transform_10(%arg0: i32) -> (i32, i32, i32) {
    %c0_i32 = arith.constant 0 : i32
    %c0_i32_0 = arith.constant 0 : i32
    %c0_i32_1 = arith.constant 0 : i32
    return %arg0, %c0_i32, %c0_i32_0 : i32, i32, i32
  }
  func.func @transform_11(%arg0: i32) -> (i32, i32, i32) {
    %c0_i32 = arith.constant 0 : i32
    %c0_i32_0 = arith.constant 0 : i32
    %c0_i32_1 = arith.constant 0 : i32
    return %arg0, %c0_i32, %c0_i32_0 : i32, i32, i32
  }
  func.func @transform_12(%arg0: i32) -> (i32, i32, i32) {
    %c0_i32 = arith.constant 0 : i32
    %c0_i32_0 = arith.constant 0 : i32
    %c0_i32_1 = arith.constant 0 : i32
    return %arg0, %c0_i32, %c0_i32_0 : i32, i32, i32
  }
  func.func @transform_13(%arg0: i32) -> (i32, i32, i32) {
    %c0_i32 = arith.constant 0 : i32
    %c0_i32_0 = arith.constant 0 : i32
    %c0_i32_1 = arith.constant 0 : i32
    return %arg0, %c0_i32, %c0_i32_0 : i32, i32, i32
  }
  func.func @transform_14(%arg0: i32) -> (i32, i32, i32) {
    %c0_i32 = arith.constant 0 : i32
    %c0_i32_0 = arith.constant 0 : i32
    %c0_i32_1 = arith.constant 0 : i32
    return %arg0, %c0_i32, %c0_i32_0 : i32, i32, i32
  }
  func.func @transform_15(%arg0: i32) -> (i32, i32, i32) {
    %c0_i32 = arith.constant 0 : i32
    %c0_i32_0 = arith.constant 0 : i32
    %c0_i32_1 = arith.constant 0 : i32
    return %arg0, %c0_i32, %c0_i32_0 : i32, i32, i32
  }
}

</mosaic_0001>

<llo_original>
// kernel: tpu_custom_call.1
$region0: #{tpu_custom_call.1}
  #allocation0 [shape = 'u32[]', space=smem, size = 0x4, offset = 0x4, fixed_abs, tag = 'smem constant byte address 0x4 - core index']
  #allocation1 [shape = 'u32[144,128]{1,0:T(1,128)}', space=vmem, size = 0x12000, scoped, tag = 'internal scratch']
  %s0 = inlined_call_operand.hbm [shape: f32[8,4,64], index: 0, kind: input, shape index: {}]
  %s1 = inlined_call_operand.vmem [shape: bf16[8,64,128], index: 1, kind: input, shape index: {}]
  %s2 = inlined_call_operand.vmem [shape: f32[8,1,128], index: 2, kind: input, shape index: {}]
  %s3 = inlined_call_operand.vmem [shape: f32[8,1,128], index: 3, kind: input, shape index: {}]
  %s4 = inlined_call_operand.hbm [shape: f32[8,1,128], index: 4, kind: input, shape index: {}]
  %s5 = inlined_call_operand.vmem [shape: bf16[8,128,128], index: 5, kind: input, shape index: {}]
  %s6 = inlined_call_operand.hbm [shape: f32[8,1,128], index: 6, kind: input, shape index: {}]
  %s7 = inlined_call_operand.hbm [shape: f32[8,1,128], index: 7, kind: input, shape index: {}]
  %s8 = inlined_call_operand.hbm [shape: f32[8,1,128], index: 8, kind: input, shape index: {}]
  %s9 = inlined_call_operand.hbm [shape: bf16[8,128,128], index: 9, kind: input, shape index: {}]
  %s10 = inlined_call_operand.vmem [shape: f32[8,1,128], index: 10, kind: input, shape index: {}]
  %s11 = inlined_call_operand.vmem [shape: f32[8,1,128], index: 11, kind: input, shape index: {}]
  %s12 = inlined_call_operand.vmem [shape: f32[8,1,128], index: 12, kind: input, shape index: {}]
  %s13 = inlined_call_operand.vmem [shape: bf16[8,128,64], index: 13, kind: input, shape index: {}]
  %s14 = inlined_call_operand.hbm [shape: f32[8,1,64], index: 14, kind: input, shape index: {}]
  %s15 = inlined_call_operand.hbm [shape: f32[8,4,64], index: 15, kind: output, shape index: {}]
  %s16 = sld [smem:[#allocation0]]
  $region121: #{tpu_custom_call.1} parent=0
    _
  %s18 = ssub.s32 1, %s16
  %s19 = scalar_select 0, %s18, %s16
  $region1: #{tpu_custom_call.1} parent=0
    #allocation2 [shape = 'u8[4096]{0}', space=vmem, size = 0x1000, scoped, tag = 'input window, operand 0']
    #allocation3 [shape = 's32[2]{0}', space=sflag, size = 0x8, scoped, tag = 'scoped memory for tpu_custom_call.1']
    #allocation4 [shape = 's32[2]{0}', space=sflag, size = 0x8, scoped, tag = 'scoped memory for tpu_custom_call.1']
    #allocation5 [shape = 'u8[1024]{0}', space=vmem, size = 0x400, scoped, tag = 'input window, operand 4']
    #allocation6 [shape = 's32[2]{0}', space=sflag, size = 0x8, scoped, tag = 'scoped memory for tpu_custom_call.1']
    #allocation7 [shape = 'u8[1024]{0}', space=vmem, size = 0x400, scoped, tag = 'input window, operand 6']
    #allocation8 [shape = 'u8[1024]{0}', space=vmem, size = 0x400, scoped, tag = 'input window, operand 7']
    #allocation9 [shape = 's32[2]{0}', space=sflag, size = 0x8, scoped, tag = 'scoped memory for tpu_custom_call.1']
    #allocation10 [shape = 'u8[1024]{0}', space=vmem, size = 0x400, scoped, tag = 'input window, operand 8']
    #allocation11 [shape = 'u8[65536]{0}', space=vmem, size = 0x10000, scoped, tag = 'input window, operand 9']
    #allocation12 [shape = 's32[2]{0}', space=sflag, size = 0x8, scoped, tag = 'scoped memory for tpu_custom_call.1']
    #allocation13 [shape = 'u8[1024]{0}', space=vmem, size = 0x400, scoped, tag = 'input window, operand 14']
    #allocation14 [shape = 'u8[4096]{0}', space=vmem, size = 0x1000, scoped, tag = 'output window, operand 0']
    %20 = vsyncpa [#allocation3], 0
    %s21 = scalar_lea.sflag [#allocation3], 1
    %22 = vsyncpa %s21, 0
    %23 = vsyncpa [#allocation6], 0
    %s24 = scalar_lea.sflag [#allocation6], 1
    %25 = vsyncpa %s24, 0
    %26 = vsyncpa [#allocation9], 0
    %s27 = scalar_lea.sflag [#allocation9], 1
    %28 = vsyncpa %s27, 0
    %29 = vsyncpa [#allocation12], 0
    %s30 = scalar_lea.sflag [#allocation12], 1
    %31 = vsyncpa %s30, 0
    %32 = vsyncpa [#allocation4], 0
    %s33 = scalar_lea.sflag [#allocation4], 1
    %34 = vsyncpa %s33, 0
    loop: start=0, step=1, limit=10
    $region2: #{tpu_custom_call.1} parent=1 // loop_pre_header
      _
    $region3: #{tpu_custom_call.1} parent=1 // loop_header
      %s36 = sphi 0, %s40
      %p37 = scmp.ge.s32.totalorder %s36, 10
      %s46 = sphi 0, %s48
      %s49 = sphi 0, %s46
      %s50 = sphi 0, %s49
      %s66 = sphi 0, %s50
      %s72 = sphi 0, %s74
      %s75 = sphi 0, %s72
      %s76 = sphi 0, %s75
      %s92 = sphi 0, %s76
      %s98 = sphi 0, %s100
      %s101 = sphi 0, %s98
      %s102 = sphi 0, %s101
      %s118 = sphi 0, %s102
      %s124 = sphi 0, %s126
      %s127 = sphi 0, %s124
      %s128 = sphi 0, %s127
      %s144 = sphi 0, %s128
      %s150 = sphi 0, %s152
      %s153 = sphi 0, %s150
      %s154 = sphi 0, %s153
      %s170 = sphi 0, %s154
      %s176 = sphi 0, %s178
      %s179 = sphi 0, %s176
      %s180 = sphi 0, %s179
      %s196 = sphi 0, %s180
      %s202 = sphi 0, %s204
      %s205 = sphi 0, %s202
      %s206 = sphi 0, %s205
      %s222 = sphi 0, %s206
      %s228 = sphi 0, %s230
      %s231 = sphi 0, %s228
      %s232 = sphi 0, %s231
      %s248 = sphi 0, %s232
      %s254 = sphi 0, %s256
      %s257 = sphi 0, %s254
      %s258 = sphi 0, %s257
      %s274 = sphi 0, %s258
      %s280 = sphi 0, %s282
      %s283 = sphi 0, %s280
      %s284 = sphi 0, %s283
      %s300 = sphi 0, %s284
      %s306 = sphi 0, %s308
      %s309 = sphi 0, %s306
      %s310 = sphi 0, %s309
      %s326 = sphi 0, %s310
      %s332 = sphi 0, %s334
      %s335 = sphi 0, %s332
      %s336 = sphi 0, %s335
      %s352 = sphi 0, %s336
      %s358 = sphi 0, %s360
      %s361 = sphi 0, %s358
      %s362 = sphi 0, %s361
      %s378 = sphi 0, %s362
      %s384 = sphi 0, %s386
      %s387 = sphi 0, %s384
      %s388 = sphi 0, %s387
      %s404 = sphi 0, %s388
      %s410 = sphi 0, %s412
      %s413 = sphi 0, %s410
      %s414 = sphi 0, %s413
      %s430 = sphi 0, %s414
      %s436 = sphi 0, %s438
      %s439 = sphi 0, %s436
      %s440 = sphi 0, %s439
      %s456 = sphi 0, %s440
    $region4: #{tpu_custom_call.1} parent=1 // loop_header_branch
      %39 = sbr.rel (%p37) target = $region8
    $region5: #{tpu_custom_call.1} parent=1 // loop_body
      %s41 = ssub.s32 %s36, 1
      %s42 = ssub.s32 %s36, 2
      %s43 = sadd.s32 %s36, 1
      %s44 = ssub.s32 %s36, %s43
      %p45 = scmp.eq.s32.totalorder %s44, 0
      %s47 = sadd.s32 %s46, 1
      %s48 = scalar_select %p45, %s46, %s47
      %p51 = pneg %p45
      %p52 = scmp.eq.s32.totalorder %s36, 7
      %p53 = por %p51, %p52
      %p54 = scmp.ne.s32.totalorder %s46, %s49
      %p55 = scmp.eq.s32.totalorder %s36, 0
      %p56 = por %p54, %p55
      %p57 = scmp.ne.s32.totalorder %s46, %s49
      %p58 = scmp.eq.s32.totalorder %s41, 7
      %p59 = por %p57, %p58
      %p60 = scmp.ne.s32.totalorder %s49, %s50
      %p61 = scmp.eq.s32.totalorder %s41, 0
      %p62 = por %p60, %p61
      %p63 = scmp.ne.s32.totalorder %s49, %s50
      %p64 = scmp.eq.s32.totalorder %s42, 7
      %p65 = por %p63, %p64
      %p67 = scmp.ne.s32.totalorder %s50, %s66
      %p68 = scmp.eq.s32.totalorder %s42, 0
      %p69 = por %p67, %p68
      %s70 = ssub.s32 %s36, %s43
      %p71 = scmp.eq.s32.totalorder %s70, 0
      %s73 = sadd.s32 %s72, 1
      %s74 = scalar_select %p71, %s72, %s73
      %p77 = pneg %p71
      %p78 = scmp.eq.s32.totalorder %s36, 7
      %p79 = por %p77, %p78
      %p80 = scmp.ne.s32.totalorder %s72, %s75
      %p81 = scmp.eq.s32.totalorder %s36, 0
      %p82 = por %p80, %p81
      %p83 = scmp.ne.s32.totalorder %s72, %s75
      %p84 = scmp.eq.s32.totalorder %s41, 7
      %p85 = por %p83, %p84
      %p86 = scmp.ne.s32.totalorder %s75, %s76
      %p87 = scmp.eq.s32.totalorder %s41, 0
      %p88 = por %p86, %p87
      %p89 = scmp.ne.s32.totalorder %s75, %s76
      %p90 = scmp.eq.s32.totalorder %s42, 7
      %p91 = por %p89, %p90
      %p93 = scmp.ne.s32.totalorder %s76, %s92
      %p94 = scmp.eq.s32.totalorder %s42, 0
      %p95 = por %p93, %p94
      %s96 = ssub.s32 %s36, %s43
      %p97 = scmp.eq.s32.totalorder %s96, 0
      %s99 = sadd.s32 %s98, 1
      %s100 = scalar_select %p97, %s98, %s99
      %p103 = pneg %p97
      %p104 = scmp.eq.s32.totalorder %s36, 7
      %p105 = por %p103, %p104
      %p106 = scmp.ne.s32.totalorder %s98, %s101
      %p107 = scmp.eq.s32.totalorder %s36, 0
      %p108 = por %p106, %p107
      %p109 = scmp.ne.s32.totalorder %s98, %s101
      %p110 = scmp.eq.s32.totalorder %s41, 7
      %p111 = por %p109, %p110
      %p112 = scmp.ne.s32.totalorder %s101, %s102
      %p113 = scmp.eq.s32.totalorder %s41, 0
      %p114 = por %p112, %p113
      %p115 = scmp.ne.s32.totalorder %s101, %s102
      %p116 = scmp.eq.s32.totalorder %s42, 7
      %p117 = por %p115, %p116
      %p119 = scmp.ne.s32.totalorder %s102, %s118
      %p120 = scmp.eq.s32.totalorder %s42, 0
      %p121 = por %p119, %p120
      %s122 = ssub.s32 %s36, %s43
      %p123 = scmp.eq.s32.totalorder %s122, 0
      %s125 = sadd.s32 %s124, 1
      %s126 = scalar_select %p123, %s124, %s125
      %p129 = pneg %p123
      %p130 = scmp.eq.s32.totalorder %s36, 7
      %p131 = por %p129, %p130
      %p132 = scmp.ne.s32.totalorder %s124, %s127
      %p133 = scmp.eq.s32.totalorder %s36, 0
      %p134 = por %p132, %p133
      %p135 = scmp.ne.s32.totalorder %s124, %s127
      %p136 = scmp.eq.s32.totalorder %s41, 7
      %p137 = por %p135, %p136
      %p138 = scmp.ne.s32.totalorder %s127, %s128
      %p139 = scmp.eq.s32.totalorder %s41, 0
      %p140 = por %p138, %p139
      %p141 = scmp.ne.s32.totalorder %s127, %s128
      %p142 = scmp.eq.s32.totalorder %s42, 7
      %p143 = por %p141, %p142
      %p145 = scmp.ne.s32.totalorder %s128, %s144
      %p146 = scmp.eq.s32.totalorder %s42, 0
      %p147 = por %p145, %p146
      %s148 = ssub.s32 %s36, %s43
      %p149 = scmp.eq.s32.totalorder %s148, 0
      %s151 = sadd.s32 %s150, 1
      %s152 = scalar_select %p149, %s150, %s151
      %p155 = pneg %p149
      %p156 = scmp.eq.s32.totalorder %s36, 7
      %p157 = por %p155, %p156
      %p158 = scmp.ne.s32.totalorder %s150, %s153
      %p159 = scmp.eq.s32.totalorder %s36, 0
      %p160 = por %p158, %p159
      %p161 = scmp.ne.s32.totalorder %s150, %s153
      %p162 = scmp.eq.s32.totalorder %s41, 7
      %p163 = por %p161, %p162
      %p164 = scmp.ne.s32.totalorder %s153, %s154
      %p165 = scmp.eq.s32.totalorder %s41, 0
      %p166 = por %p164, %p165
      %p167 = scmp.ne.s32.totalorder %s153, %s154
      %p168 = scmp.eq.s32.totalorder %s42, 7
      %p169 = por %p167, %p168
      %p171 = scmp.ne.s32.totalorder %s154, %s170
      %p172 = scmp.eq.s32.totalorder %s42, 0
      %p173 = por %p171, %p172
      %s174 = ssub.s32 %s36, %s43
      %p175 = scmp.eq.s32.totalorder %s174, 0
      %s177 = sadd.s32 %s176, 1
      %s178 = scalar_select %p175, %s176, %s177
      %p181 = pneg %p175
      %p182 = scmp.eq.s32.totalorder %s36, 7
      %p183 = por %p181, %p182
      %p184 = scmp.ne.s32.totalorder %s176, %s179
      %p185 = scmp.eq.s32.totalorder %s36, 0
      %p186 = por %p184, %p185
      %p187 = scmp.ne.s32.totalorder %s176, %s179
      %p188 = scmp.eq.s32.totalorder %s41, 7
      %p189 = por %p187, %p188
      %p190 = scmp.ne.s32.totalorder %s179, %s180
      %p191 = scmp.eq.s32.totalorder %s41, 0
      %p192 = por %p190, %p191
      %p193 = scmp.ne.s32.totalorder %s179, %s180
      %p194 = scmp.eq.s32.totalorder %s42, 7
      %p195 = por %p193, %p194
      %p197 = scmp.ne.s32.totalorder %s180, %s196
      %p198 = scmp.eq.s32.totalorder %s42, 0
      %p199 = por %p197, %p198
      %s200 = ssub.s32 %s36, %s43
      %p201 = scmp.eq.s32.totalorder %s200, 0
      %s203 = sadd.s32 %s202, 1
      %s204 = scalar_select %p201, %s202, %s203
      %p207 = pneg %p201
      %p208 = scmp.eq.s32.totalorder %s36, 7
      %p209 = por %p207, %p208
      %p210 = scmp.ne.s32.totalorder %s202, %s205
      %p211 = scmp.eq.s32.totalorder %s36, 0
      %p212 = por %p210, %p211
      %p213 = scmp.ne.s32.totalorder %s202, %s205
      %p214 = scmp.eq.s32.totalorder %s41, 7
      %p215 = por %p213, %p214
      %p216 = scmp.ne.s32.totalorder %s205, %s206
      %p217 = scmp.eq.s32.totalorder %s41, 0
      %p218 = por %p216, %p217
      %p219 = scmp.ne.s32.totalorder %s205, %s206
      %p220 = scmp.eq.s32.totalorder %s42, 7
      %p221 = por %p219, %p220
      %p223 = scmp.ne.s32.totalorder %s206, %s222
      %p224 = scmp.eq.s32.totalorder %s42, 0
      %p225 = por %p223, %p224
      %s226 = ssub.s32 %s36, %s43
      %p227 = scmp.eq.s32.totalorder %s226, 0
      %s229 = sadd.s32 %s228, 1
      %s230 = scalar_select %p227, %s228, %s229
      %p233 = pneg %p227
      %p234 = scmp.eq.s32.totalorder %s36, 7
      %p235 = por %p233, %p234
      %p236 = scmp.ne.s32.totalorder %s228, %s231
      %p237 = scmp.eq.s32.totalorder %s36, 0
      %p238 = por %p236, %p237
      %p239 = scmp.ne.s32.totalorder %s228, %s231
      %p240 = scmp.eq.s32.totalorder %s41, 7
      %p241 = por %p239, %p240
      %p242 = scmp.ne.s32.totalorder %s231, %s232
      %p243 = scmp.eq.s32.totalorder %s41, 0
      %p244 = por %p242, %p243
      %p245 = scmp.ne.s32.totalorder %s231, %s232
      %p246 = scmp.eq.s32.totalorder %s42, 7
      %p247 = por %p245, %p246
      %p249 = scmp.ne.s32.totalorder %s232, %s248
      %p250 = scmp.eq.s32.totalorder %s42, 0
      %p251 = por %p249, %p250
      %s252 = ssub.s32 %s36, %s43
      %p253 = scmp.eq.s32.totalorder %s252, 0
      %s255 = sadd.s32 %s254, 1
      %s256 = scalar_select %p253, %s254, %s255
      %p259 = pneg %p253
      %p260 = scmp.eq.s32.totalorder %s36, 7
      %p261 = por %p259, %p260
      %p262 = scmp.ne.s32.totalorder %s254, %s257
      %p263 = scmp.eq.s32.totalorder %s36, 0
      %p264 = por %p262, %p263
      %p265 = scmp.ne.s32.totalorder %s254, %s257
      %p266 = scmp.eq.s32.totalorder %s41, 7
      %p267 = por %p265, %p266
      %p268 = scmp.ne.s32.totalorder %s257, %s258
      %p269 = scmp.eq.s32.totalorder %s41, 0
      %p270 = por %p268, %p269
      %p271 = scmp.ne.s32.totalorder %s257, %s258
      %p272 = scmp.eq.s32.totalorder %s42, 7
      %p273 = por %p271, %p272
      %p275 = scmp.ne.s32.totalorder %s258, %s274
      %p276 = scmp.eq.s32.totalorder %s42, 0
      %p277 = por %p275, %p276
      %s278 = ssub.s32 %s36, %s43
      %p279 = scmp.eq.s32.totalorder %s278, 0
      %s281 = sadd.s32 %s280, 1
      %s282 = scalar_select %p279, %s280, %s281
      %p285 = pneg %p279
      %p286 = scmp.eq.s32.totalorder %s36, 7
      %p287 = por %p285, %p286
      %p288 = scmp.ne.s32.totalorder %s280, %s283
      %p289 = scmp.eq.s32.totalorder %s36, 0
      %p290 = por %p288, %p289
      %p291 = scmp.ne.s32.totalorder %s280, %s283
      %p292 = scmp.eq.s32.totalorder %s41, 7
      %p293 = por %p291, %p292
      %p294 = scmp.ne.s32.totalorder %s283, %s284
      %p295 = scmp.eq.s32.totalorder %s41, 0
      %p296 = por %p294, %p295
      %p297 = scmp.ne.s32.totalorder %s283, %s284
      %p298 = scmp.eq.s32.totalorder %s42, 7
      %p299 = por %p297, %p298
      %p301 = scmp.ne.s32.totalorder %s284, %s300
      %p302 = scmp.eq.s32.totalorder %s42, 0
      %p303 = por %p301, %p302
      %s304 = ssub.s32 %s36, %s43
      %p305 = scmp.eq.s32.totalorder %s304, 0
      %s307 = sadd.s32 %s306, 1
      %s308 = scalar_select %p305, %s306, %s307
      %p311 = pneg %p305
      %p312 = scmp.eq.s32.totalorder %s36, 7
      %p313 = por %p311, %p312
      %p314 = scmp.ne.s32.totalorder %s306, %s309
      %p315 = scmp.eq.s32.totalorder %s36, 0
      %p316 = por %p314, %p315
      %p317 = scmp.ne.s32.totalorder %s306, %s309
      %p318 = scmp.eq.s32.totalorder %s41, 7
      %p319 = por %p317, %p318
      %p320 = scmp.ne.s32.totalorder %s309, %s310
      %p321 = scmp.eq.s32.totalorder %s41, 0
      %p322 = por %p320, %p321
      %p323 = scmp.ne.s32.totalorder %s309, %s310
      %p324 = scmp.eq.s32.totalorder %s42, 7
      %p325 = por %p323, %p324
      %p327 = scmp.ne.s32.totalorder %s310, %s326
      %p328 = scmp.eq.s32.totalorder %s42, 0
      %p329 = por %p327, %p328
      %s330 = ssub.s32 %s36, %s43
      %p331 = scmp.eq.s32.totalorder %s330, 0
      %s333 = sadd.s32 %s332, 1
      %s334 = scalar_select %p331, %s332, %s333
      %p337 = pneg %p331
      %p338 = scmp.eq.s32.totalorder %s36, 7
      %p339 = por %p337, %p338
      %p340 = scmp.ne.s32.totalorder %s332, %s335
      %p341 = scmp.eq.s32.totalorder %s36, 0
      %p342 = por %p340, %p341
      %p343 = scmp.ne.s32.totalorder %s332, %s335
      %p344 = scmp.eq.s32.totalorder %s41, 7
      %p345 = por %p343, %p344
      %p346 = scmp.ne.s32.totalorder %s335, %s336
      %p347 = scmp.eq.s32.totalorder %s41, 0
      %p348 = por %p346, %p347
      %p349 = scmp.ne.s32.totalorder %s335, %s336
      %p350 = scmp.eq.s32.totalorder %s42, 7
      %p351 = por %p349, %p350
      %p353 = scmp.ne.s32.totalorder %s336, %s352
      %p354 = scmp.eq.s32.totalorder %s42, 0
      %p355 = por %p353, %p354
      %s356 = ssub.s32 %s36, %s43
      %p357 = scmp.eq.s32.totalorder %s356, 0
      %s359 = sadd.s32 %s358, 1
      %s360 = scalar_select %p357, %s358, %s359
      %p363 = pneg %p357
      %p364 = scmp.eq.s32.totalorder %s36, 7
      %p365 = por %p363, %p364
      %p366 = scmp.ne.s32.totalorder %s358, %s361
      %p367 = scmp.eq.s32.totalorder %s36, 0
      %p368 = por %p366, %p367
      %p369 = scmp.ne.s32.totalorder %s358, %s361
      %p370 = scmp.eq.s32.totalorder %s41, 7
      %p371 = por %p369, %p370
      %p372 = scmp.ne.s32.totalorder %s361, %s362
      %p373 = scmp.eq.s32.totalorder %s41, 0
      %p374 = por %p372, %p373
      %p375 = scmp.ne.s32.totalorder %s361, %s362
      %p376 = scmp.eq.s32.totalorder %s42, 7
      %p377 = por %p375, %p376
      %p379 = scmp.ne.s32.totalorder %s362, %s378
      %p380 = scmp.eq.s32.totalorder %s42, 0
      %p381 = por %p379, %p380
      %s382 = ssub.s32 %s36, %s43
      %p383 = scmp.eq.s32.totalorder %s382, 0
      %s385 = sadd.s32 %s384, 1
      %s386 = scalar_select %p383, %s384, %s385
      %p389 = pneg %p383
      %p390 = scmp.eq.s32.totalorder %s36, 7
      %p391 = por %p389, %p390
      %p392 = scmp.ne.s32.totalorder %s384, %s387
      %p393 = scmp.eq.s32.totalorder %s36, 0
      %p394 = por %p392, %p393
      %p395 = scmp.ne.s32.totalorder %s384, %s387
      %p396 = scmp.eq.s32.totalorder %s41, 7
      %p397 = por %p395, %p396
      %p398 = scmp.ne.s32.totalorder %s387, %s388
      %p399 = scmp.eq.s32.totalorder %s41, 0
      %p400 = por %p398, %p399
      %p401 = scmp.ne.s32.totalorder %s387, %s388
      %p402 = scmp.eq.s32.totalorder %s42, 7
      %p403 = por %p401, %p402
      %p405 = scmp.ne.s32.totalorder %s388, %s404
      %p406 = scmp.eq.s32.totalorder %s42, 0
      %p407 = por %p405, %p406
      %s408 = ssub.s32 %s36, %s43
      %p409 = scmp.eq.s32.totalorder %s408, 0
      %s411 = sadd.s32 %s410, 1
      %s412 = scalar_select %p409, %s410, %s411
      %p415 = pneg %p409
      %p416 = scmp.eq.s32.totalorder %s36, 7
      %p417 = por %p415, %p416
      %p418 = scmp.ne.s32.totalorder %s410, %s413
      %p419 = scmp.eq.s32.totalorder %s36, 0
      %p420 = por %p418, %p419
      %p421 = scmp.ne.s32.totalorder %s410, %s413
      %p422 = scmp.eq.s32.totalorder %s41, 7
      %p423 = por %p421, %p422
      %p424 = scmp.ne.s32.totalorder %s413, %s414
      %p425 = scmp.eq.s32.totalorder %s41, 0
      %p426 = por %p424, %p425
      %p427 = scmp.ne.s32.totalorder %s413, %s414
      %p428 = scmp.eq.s32.totalorder %s42, 7
      %p429 = por %p427, %p428
      %p431 = scmp.ne.s32.totalorder %s414, %s430
      %p432 = scmp.eq.s32.totalorder %s42, 0
      %p433 = por %p431, %p432
      %s434 = ssub.s32 %s36, %s43
      %p435 = scmp.eq.s32.totalorder %s434, 0
      %s437 = sadd.s32 %s436, 1
      %s438 = scalar_select %p435, %s436, %s437
      %p441 = pneg %p435
      %p442 = scmp.eq.s32.totalorder %s36, 7
      %p443 = por %p441, %p442
      %p444 = scmp.ne.s32.totalorder %s436, %s439
      %p445 = scmp.eq.s32.totalorder %s36, 0
      %p446 = por %p444, %p445
      %p447 = scmp.ne.s32.totalorder %s436, %s439
      %p448 = scmp.eq.s32.totalorder %s41, 7
      %p449 = por %p447, %p448
      %p450 = scmp.ne.s32.totalorder %s439, %s440
      %p451 = scmp.eq.s32.totalorder %s41, 0
      %p452 = por %p450, %p451
      %p453 = scmp.ne.s32.totalorder %s439, %s440
      %p454 = scmp.eq.s32.totalorder %s42, 7
      %p455 = por %p453, %p454
      %p457 = scmp.ne.s32.totalorder %s440, %s456
      %p458 = scmp.eq.s32.totalorder %s42, 0
      %p459 = por %p457, %p458
      %p460 = scmp.le.s32.totalorder 1, %s36
      %p461 = scmp.lt.s32.totalorder %s36, 9
      %p462 = pnand %p460, %p461
      %p463 = pneg %p462
      // Predicated region
      $region9: #{tpu_custom_call.1} parent=5 // pred_check
        _
      $region10: #{tpu_custom_call.1} parent=5 // pred_check_branch
        %465 = sbr.rel (%p462) target = $region12
      $region11: #{tpu_custom_call.1} parent=5 // pred_region
        %s466 = ssub.s32 %s36, 1
      $region12: #{tpu_custom_call.1} parent=5 // pred_fallthru
        _
      %p467 = scmp.lt.s32.totalorder %s36, 8
      // Predicated region
      $region13: #{tpu_custom_call.1} parent=5 // pred_check
        %p468 = pneg %p467
      $region14: #{tpu_custom_call.1} parent=5 // pred_check_branch
        %470 = sbr.rel (%p468) target = $region16
      $region15: #{tpu_custom_call.1} parent=5 // pred_region
        // Predicated region
        $region17: #{tpu_custom_call.1} parent=15 // pred_check
          %p471 = pneg %p56
        $region18: #{tpu_custom_call.1} parent=15 // pred_check_branch
          %473 = sbr.rel (%p471) target = $region20
        $region19: #{tpu_custom_call.1} parent=15 // pred_region
          %s474 = sand.u32 %s46, 1
          %s475 = scalar_lea.sflag [#allocation3], %s474
          %s476 = sand.u32 %s46, 1
          %s477 = smul.addr %s476, 4
          %s478 = scalar_lea.vmem [#allocation2], %s477
          %s480 = ssub.s32 64, 64
          %481 = vsyncadd %s475, %s480
          %s482 = smul.addr %s36, 64
          %s483 = scalar_lea.hbm %s0, %s482
          %s485 = sshll.u32 %s478, 4
          %s486 = int_to_ptr.vmem [resolvable:$true] %s485
          %488 = dma.hbm_to_vmem [thread:$0]  %s483, 64, %s486, %s475
        $region20: #{tpu_custom_call.1} parent=15 // pred_fallthru
          _
        // Predicated region
        $region21: #{tpu_custom_call.1} parent=15 // pred_check
          %p489 = pneg %p82
        $region22: #{tpu_custom_call.1} parent=15 // pred_check_branch
          %491 = sbr.rel (%p489) target = $region24
        $region23: #{tpu_custom_call.1} parent=15 // pred_region
          %p492 = scmp.lt.s32.totalorder %s36, 7
          %s493 = scalar_select %p492, %s36, 7
          %s494 = smul.addr %s493, 8
          %s495 = smul.addr %s494, 4
          %s496 = scalar_lea.vmem %s1, %s495
        $region24: #{tpu_custom_call.1} parent=15 // pred_fallthru
          _
        // Predicated region
        $region25: #{tpu_custom_call.1} parent=15 // pred_check
          %p497 = pneg %p108
        $region26: #{tpu_custom_call.1} parent=15 // pred_check_branch
          %499 = sbr.rel (%p497) target = $region28
        $region27: #{tpu_custom_call.1} parent=15 // pred_region
          %p500 = scmp.lt.s32.totalorder %s36, 7
          %s501 = scalar_select %p500, %s36, 7
          %s502 = scalar_lea.vmem %s2, %s501
        $region28: #{tpu_custom_call.1} parent=15 // pred_fallthru
          _
        // Predicated region
        $region29: #{tpu_custom_call.1} parent=15 // pred_check
          %p503 = pneg %p134
        $region30: #{tpu_custom_call.1} parent=15 // pred_check_branch
          %505 = sbr.rel (%p503) target = $region32
        $region31: #{tpu_custom_call.1} parent=15 // pred_region
          %p506 = scmp.lt.s32.totalorder %s36, 7
          %s507 = scalar_select %p506, %s36, 7
          %s508 = scalar_lea.vmem %s3, %s507
        $region32: #{tpu_custom_call.1} parent=15 // pred_fallthru
          _
        // Predicated region
        $region33: #{tpu_custom_call.1} parent=15 // pred_check
          %p509 = pneg %p160
        $region34: #{tpu_custom_call.1} parent=15 // pred_check_branch
          %511 = sbr.rel (%p509) target = $region36
        $region35: #{tpu_custom_call.1} parent=15 // pred_region
          %s512 = sand.u32 %s36, 1
          %s513 = scalar_lea.sflag [#allocation6], %s512
          %s514 = sand.u32 %s150, 1
          %s515 = scalar_lea.vmem [#allocation5], %s514
          %s517 = ssub.s32 16, 16
          %518 = vsyncadd %s513, %s517
          %s519 = smul.addr %s36, 16
          %s520 = scalar_lea.hbm %s4, %s519
          %s522 = sshll.u32 %s515, 4
          %s523 = int_to_ptr.vmem [resolvable:$true] %s522
          %525 = dma.hbm_to_vmem [thread:$0]  %s520, 16, %s523, %s513
        $region36: #{tpu_custom_call.1} parent=15 // pred_fallthru
          _
        // Predicated region
        $region37: #{tpu_custom_call.1} parent=15 // pred_check
          %p526 = pneg %p186
        $region38: #{tpu_custom_call.1} parent=15 // pred_check_branch
          %528 = sbr.rel (%p526) target = $region40
        $region39: #{tpu_custom_call.1} parent=15 // pred_region
          %p529 = scmp.lt.s32.totalorder %s36, 7
          %s530 = scalar_select %p529, %s36, 7
          %s531 = smul.addr %s530, 16
          %s532 = smul.addr %s531, 4
          %s533 = scalar_lea.vmem %s5, %s532
        $region40: #{tpu_custom_call.1} parent=15 // pred_fallthru
          _
        // Predicated region
        $region41: #{tpu_custom_call.1} parent=15 // pred_check
          %p534 = pneg %p212
        $region42: #{tpu_custom_call.1} parent=15 // pred_check_branch
          %536 = sbr.rel (%p534) target = $region44
        $region43: #{tpu_custom_call.1} parent=15 // pred_region
          %s537 = sand.u32 %s36, 1
          %s538 = scalar_lea.sflag [#allocation6], %s537
          %s539 = sand.u32 %s202, 1
          %s540 = scalar_lea.vmem [#allocation7], %s539
          %s542 = ssub.s32 16, 16
          %543 = vsyncadd %s538, %s542
          %s544 = smul.addr %s36, 16
          %s545 = scalar_lea.hbm %s6, %s544
          %s547 = sshll.u32 %s540, 4
          %s548 = int_to_ptr.vmem [resolvable:$true] %s547
          %550 = dma.hbm_to_vmem [thread:$0]  %s545, 16, %s548, %s538
        $region44: #{tpu_custom_call.1} parent=15 // pred_fallthru
          _
        // Predicated region
        $region45: #{tpu_custom_call.1} parent=15 // pred_check
          %p551 = pneg %p238
        $region46: #{tpu_custom_call.1} parent=15 // pred_check_branch
          %553 = sbr.rel (%p551) target = $region48
        $region47: #{tpu_custom_call.1} parent=15 // pred_region
          %s554 = sand.u32 %s36, 1
          %s555 = scalar_lea.sflag [#allocation9], %s554
          %s556 = sand.u32 %s228, 1
          %s557 = scalar_lea.vmem [#allocation8], %s556
          %s559 = ssub.s32 16, 16
          %560 = vsyncadd %s555, %s559
          %s561 = smul.addr %s36, 16
          %s562 = scalar_lea.hbm %s7, %s561
          %s564 = sshll.u32 %s557, 4
          %s565 = int_to_ptr.vmem [resolvable:$true] %s564
          %567 = dma.hbm_to_vmem [thread:$0]  %s562, 16, %s565, %s555
        $region48: #{tpu_custom_call.1} parent=15 // pred_fallthru
          _
        // Predicated region
        $region49: #{tpu_custom_call.1} parent=15 // pred_check
          %p568 = pneg %p264
        $region50: #{tpu_custom_call.1} parent=15 // pred_check_branch
          %570 = sbr.rel (%p568) target = $region52
        $region51: #{tpu_custom_call.1} parent=15 // pred_region
          %s571 = sand.u32 %s36, 1
          %s572 = scalar_lea.sflag [#allocation9], %s571
          %s573 = sand.u32 %s254, 1
          %s574 = scalar_lea.vmem [#allocation10], %s573
          %s576 = ssub.s32 16, 16
          %577 = vsyncadd %s572, %s576
          %s578 = smul.addr %s36, 16
          %s579 = scalar_lea.hbm %s8, %s578
          %s581 = sshll.u32 %s574, 4
          %s582 = int_to_ptr.vmem [resolvable:$true] %s581
          %584 = dma.hbm_to_vmem [thread:$0]  %s579, 16, %s582, %s572
        $region52: #{tpu_custom_call.1} parent=15 // pred_fallthru
          _
        // Predicated region
        $region53: #{tpu_custom_call.1} parent=15 // pred_check
          %p585 = pneg %p290
        $region54: #{tpu_custom_call.1} parent=15 // pred_check_branch
          %587 = sbr.rel (%p585) target = $region56
        $region55: #{tpu_custom_call.1} parent=15 // pred_region
          %s588 = sand.u32 %s36, 1
          %s589 = scalar_lea.sflag [#allocation12], %s588
          %s590 = sand.u32 %s280, 1
          %s591 = smul.addr %s590, 64
          %s592 = scalar_lea.vmem [#allocation11], %s591
          %s594 = ssub.s32 1024, 1024
          %595 = vsyncadd %s589, %s594
          %s596 = smul.addr %s36, 16
          %s597 = smul.addr %s596, 64
          %s598 = scalar_lea.hbm %s9, %s597
          %s599 = sshll.u32 %s592, 4
          %s600 = int_to_ptr.vmem [resolvable:$true] %s599
          %605 = dma.hbm_to_vmem [thread:$0]  %s598, 1024, %s600, %s589, 64, 64, 4
        $region56: #{tpu_custom_call.1} parent=15 // pred_fallthru
          _
        // Predicated region
        $region57: #{tpu_custom_call.1} parent=15 // pred_check
          %p606 = pneg %p316
        $region58: #{tpu_custom_call.1} parent=15 // pred_check_branch
          %608 = sbr.rel (%p606) target = $region60
        $region59: #{tpu_custom_call.1} parent=15 // pred_region
          %p609 = scmp.lt.s32.totalorder %s36, 7
          %s610 = scalar_select %p609, %s36, 7
          %s611 = scalar_lea.vmem %s10, %s610
        $region60: #{tpu_custom_call.1} parent=15 // pred_fallthru
          _
        // Predicated region
        $region61: #{tpu_custom_call.1} parent=15 // pred_check
          %p612 = pneg %p342
        $region62: #{tpu_custom_call.1} parent=15 // pred_check_branch
          %614 = sbr.rel (%p612) target = $region64
        $region63: #{tpu_custom_call.1} parent=15 // pred_region
          %p615 = scmp.lt.s32.totalorder %s36, 7
          %s616 = scalar_select %p615, %s36, 7
          %s617 = scalar_lea.vmem %s11, %s616
        $region64: #{tpu_custom_call.1} parent=15 // pred_fallthru
          _
        // Predicated region
        $region65: #{tpu_custom_call.1} parent=15 // pred_check
          %p618 = pneg %p368
        $region66: #{tpu_custom_call.1} parent=15 // pred_check_branch
          %620 = sbr.rel (%p618) target = $region68
        $region67: #{tpu_custom_call.1} parent=15 // pred_region
          %p621 = scmp.lt.s32.totalorder %s36, 7
          %s622 = scalar_select %p621, %s36, 7
          %s623 = scalar_lea.vmem %s12, %s622
        $region68: #{tpu_custom_call.1} parent=15 // pred_fallthru
          _
        // Predicated region
        $region69: #{tpu_custom_call.1} parent=15 // pred_check
          %p624 = pneg %p394
        $region70: #{tpu_custom_call.1} parent=15 // pred_check_branch
          %626 = sbr.rel (%p624) target = $region72
        $region71: #{tpu_custom_call.1} parent=15 // pred_region
          %p627 = scmp.lt.s32.totalorder %s36, 7
          %s628 = scalar_select %p627, %s36, 7
          %s629 = smul.addr %s628, 16
          %s630 = smul.addr %s629, 4
          %s631 = scalar_lea.vmem %s13, %s630
        $region72: #{tpu_custom_call.1} parent=15 // pred_fallthru
          _
        // Predicated region
        $region73: #{tpu_custom_call.1} parent=15 // pred_check
          %p632 = pneg %p420
        $region74: #{tpu_custom_call.1} parent=15 // pred_check_branch
          %634 = sbr.rel (%p632) target = $region76
        $region75: #{tpu_custom_call.1} parent=15 // pred_region
          %s635 = sand.u32 %s36, 1
          %s636 = scalar_lea.sflag [#allocation12], %s635
          %s637 = sand.u32 %s410, 1
          %s638 = scalar_lea.vmem [#allocation13], %s637
          %s640 = ssub.s32 16, 16
          %641 = vsyncadd %s636, %s640
          %s642 = smul.addr %s36, 16
          %s643 = scalar_lea.hbm %s14, %s642
          %s645 = sshll.u32 %s638, 4
          %s646 = int_to_ptr.vmem [resolvable:$true] %s645
          %648 = dma.hbm_to_vmem [thread:$0]  %s643, 16, %s646, %s636
        $region76: #{tpu_custom_call.1} parent=15 // pred_fallthru
          _
      $region16: #{tpu_custom_call.1} parent=5 // pred_fallthru
        _
      %p649 = scmp.le.s32.totalorder 1, %s36
      %p650 = scmp.lt.s32.totalorder %s36, 9
      %p651 = pnand %p649, %p650
      %p652 = pneg %p651
      // Predicated region
      $region77: #{tpu_custom_call.1} parent=5 // pred_check
        _
      $region78: #{tpu_custom_call.1} parent=5 // pred_check_branch
        %654 = sbr.rel (%p651) target = $region80
      $region79: #{tpu_custom_call.1} parent=5 // pred_region
        %s655 = ssub.s32 %s36, 1
        %s656 = sand.u32 %s49, 1
        %s657 = scalar_lea.sflag [#allocation3], %s656
        %s658 = sand.u32 %s49, 1
        %s659 = smul.addr %s658, 4
        %s660 = scalar_lea.vmem [#allocation2], %s659
        // Predicated region
        $region81: #{tpu_custom_call.1} parent=79 // pred_check
          %p661 = pneg %p62
        $region82: #{tpu_custom_call.1} parent=79 // pred_check_branch
          %663 = sbr.rel (%p661) target = $region84
        $region83: #{tpu_custom_call.1} parent=79 // pred_region
          %664 = dma.done %s657, 64
        $region84: #{tpu_custom_call.1} parent=79 // pred_fallthru
          _
        %s665 = sand.u32 %s41, 1
        %s666 = scalar_lea.sflag [#allocation6], %s665
        %s667 = sand.u32 %s153, 1
        %s668 = scalar_lea.vmem [#allocation5], %s667
        // Predicated region
        $region85: #{tpu_custom_call.1} parent=79 // pred_check
          %p669 = pneg %p166
        $region86: #{tpu_custom_call.1} parent=79 // pred_check_branch
          %671 = sbr.rel (%p669) target = $region88
        $region87: #{tpu_custom_call.1} parent=79 // pred_region
          %672 = dma.done %s666, 16
        $region88: #{tpu_custom_call.1} parent=79 // pred_fallthru
          _
        %s673 = sand.u32 %s41, 1
        %s674 = scalar_lea.sflag [#allocation6], %s673
        %s675 = sand.u32 %s205, 1
        %s676 = scalar_lea.vmem [#allocation7], %s675
        // Predicated region
        $region89: #{tpu_custom_call.1} parent=79 // pred_check
          %p677 = pneg %p218
        $region90: #{tpu_custom_call.1} parent=79 // pred_check_branch
          %679 = sbr.rel (%p677) target = $region92
        $region91: #{tpu_custom_call.1} parent=79 // pred_region
          %680 = dma.done %s674, 16
        $region92: #{tpu_custom_call.1} parent=79 // pred_fallthru
          _
        %s681 = sand.u32 %s41, 1
        %s682 = scalar_lea.sflag [#allocation9], %s681
        %s683 = sand.u32 %s231, 1
        %s684 = scalar_lea.vmem [#allocation8], %s683
        // Predicated region
        $region93: #{tpu_custom_call.1} parent=79 // pred_check
          %p685 = pneg %p244
        $region94: #{tpu_custom_call.1} parent=79 // pred_check_branch
          %687 = sbr.rel (%p685) target = $region96
        $region95: #{tpu_custom_call.1} parent=79 // pred_region
          %688 = dma.done %s682, 16
        $region96: #{tpu_custom_call.1} parent=79 // pred_fallthru
          _
        %s689 = sand.u32 %s41, 1
        %s690 = scalar_lea.sflag [#allocation9], %s689
        %s691 = sand.u32 %s257, 1
        %s692 = scalar_lea.vmem [#allocation10], %s691
        // Predicated region
        $region97: #{tpu_custom_call.1} parent=79 // pred_check
          %p693 = pneg %p270
        $region98: #{tpu_custom_call.1} parent=79 // pred_check_branch
          %695 = sbr.rel (%p693) target = $region100
        $region99: #{tpu_custom_call.1} parent=79 // pred_region
          %696 = dma.done %s690, 16
        $region100: #{tpu_custom_call.1} parent=79 // pred_fallthru
          _
        %s697 = sand.u32 %s41, 1
        %s698 = scalar_lea.sflag [#allocation12], %s697
        %s699 = sand.u32 %s283, 1
        %s700 = smul.addr %s699, 64
        %s701 = scalar_lea.vmem [#allocation11], %s700
        // Predicated region
        $region101: #{tpu_custom_call.1} parent=79 // pred_check
          %p702 = pneg %p296
        $region102: #{tpu_custom_call.1} parent=79 // pred_check_branch
          %704 = sbr.rel (%p702) target = $region104
        $region103: #{tpu_custom_call.1} parent=79 // pred_region
          %705 = dma.done %s698, 1024
        $region104: #{tpu_custom_call.1} parent=79 // pred_fallthru
          _
        %s706 = sand.u32 %s41, 1
        %s707 = scalar_lea.sflag [#allocation12], %s706
        %s708 = sand.u32 %s413, 1
        %s709 = scalar_lea.vmem [#allocation13], %s708
        // Predicated region
        $region105: #{tpu_custom_call.1} parent=79 // pred_check
          %p710 = pneg %p426
        $region106: #{tpu_custom_call.1} parent=79 // pred_check_branch
          %712 = sbr.rel (%p710) target = $region108
        $region107: #{tpu_custom_call.1} parent=79 // pred_region
          %713 = dma.done %s707, 16
        $region108: #{tpu_custom_call.1} parent=79 // pred_fallthru
          _
        %s714 = sand.u32 %s49, 1
        %s715 = scalar_lea.sflag [#allocation3], %s714
        %s716 = sand.u32 %s49, 1
        %s717 = smul.addr %s716, 4
        %s718 = scalar_lea.vmem [#allocation2], %s717
        %p719 = pneg %p62
        %p720 = pneg %p59
        %p721 = scmp.lt.s32.totalorder %s41, 7
        %s722 = scalar_select %p721, %s41, 7
        %s723 = smul.addr %s722, 8
        %s724 = smul.addr %s723, 4
        %s725 = scalar_lea.vmem %s1, %s724
        %p726 = pneg %p88
        %p727 = pneg %p85
        %p728 = scmp.lt.s32.totalorder %s41, 7
        %s729 = scalar_select %p728, %s41, 7
        %s730 = scalar_lea.vmem %s2, %s729
        %p731 = pneg %p114
        %p732 = pneg %p111
        %p733 = scmp.lt.s32.totalorder %s41, 7
        %s734 = scalar_select %p733, %s41, 7
        %s735 = scalar_lea.vmem %s3, %s734
        %p736 = pneg %p140
        %p737 = pneg %p137
        %s738 = sand.u32 %s41, 1
        %s739 = scalar_lea.sflag [#allocation6], %s738
        %s740 = sand.u32 %s153, 1
        %s741 = scalar_lea.vmem [#allocation5], %s740
        %p742 = pneg %p166
        %p743 = pneg %p163
        %p744 = scmp.lt.s32.totalorder %s41, 7
        %s745 = scalar_select %p744, %s41, 7
        %s746 = smul.addr %s745, 16
        %s747 = smul.addr %s746, 4
        %s748 = scalar_lea.vmem %s5, %s747
        %p749 = pneg %p192
        %p750 = pneg %p189
        %s751 = sand.u32 %s41, 1
        %s752 = scalar_lea.sflag [#allocation6], %s751
        %s753 = sand.u32 %s205, 1
        %s754 = scalar_lea.vmem [#allocation7], %s753
        %p755 = pneg %p218
        %p756 = pneg %p215
        %s757 = sand.u32 %s41, 1
        %s758 = scalar_lea.sflag [#allocation9], %s757
        %s759 = sand.u32 %s231, 1
        %s760 = scalar_lea.vmem [#allocation8], %s759
        %p761 = pneg %p244
        %p762 = pneg %p241
        %s763 = sand.u32 %s41, 1
        %s764 = scalar_lea.sflag [#allocation9], %s763
        %s765 = sand.u32 %s257, 1
        %s766 = scalar_lea.vmem [#allocation10], %s765
        %p767 = pneg %p270
        %p768 = pneg %p267
        %s769 = sand.u32 %s41, 1
        %s770 = scalar_lea.sflag [#allocation12], %s769
        %s771 = sand.u32 %s283, 1
        %s772 = smul.addr %s771, 64
        %s773 = scalar_lea.vmem [#allocation11], %s772
        %p774 = pneg %p296
        %p775 = pneg %p293
        %p776 = scmp.lt.s32.totalorder %s41, 7
        %s777 = scalar_select %p776, %s41, 7
        %s778 = scalar_lea.vmem %s10, %s777
        %p779 = pneg %p322
        %p780 = pneg %p319
        %p781 = scmp.lt.s32.totalorder %s41, 7
        %s782 = scalar_select %p781, %s41, 7
        %s783 = scalar_lea.vmem %s11, %s782
        %p784 = pneg %p348
        %p785 = pneg %p345
        %p786 = scmp.lt.s32.totalorder %s41, 7
        %s787 = scalar_select %p786, %s41, 7
        %s788 = scalar_lea.vmem %s12, %s787
        %p789 = pneg %p374
        %p790 = pneg %p371
        %p791 = scmp.lt.s32.totalorder %s41, 7
        %s792 = scalar_select %p791, %s41, 7
        %s793 = smul.addr %s792, 16
        %s794 = smul.addr %s793, 4
        %s795 = scalar_lea.vmem %s13, %s794
        %p796 = pneg %p400
        %p797 = pneg %p397
        %s798 = sand.u32 %s41, 1
        %s799 = scalar_lea.sflag [#allocation12], %s798
        %s800 = sand.u32 %s413, 1
        %s801 = scalar_lea.vmem [#allocation13], %s800
        %p802 = pneg %p426
        %p803 = pneg %p423
        %p804 = pneg %p452
        %p805 = pneg %p449
        %s806 = sand.u32 %s439, 1
        %s807 = scalar_lea.sflag [#allocation4], %s806
        %s808 = sand.u32 %s439, 1
        %s809 = smul.addr %s808, 4
        %s810 = scalar_lea.vmem [#allocation14], %s809
        %p811 = scmp.lt.s32.totalorder %s41, 7
        %s812 = scalar_select %p811, %s41, 7
        %s813 = smul.addr %s812, 8
        %s814 = smul.addr %s813, 4
        %s815 = scalar_lea.vmem %s1, %s814
        %p816 = scmp.lt.s32.totalorder %s41, 7
        %s817 = scalar_select %p816, %s41, 7
        %s818 = scalar_lea.vmem %s2, %s817
        %p819 = scmp.lt.s32.totalorder %s41, 7
        %s820 = scalar_select %p819, %s41, 7
        %s821 = scalar_lea.vmem %s3, %s820
        %p822 = scmp.lt.s32.totalorder %s41, 7
        %s823 = scalar_select %p822, %s41, 7
        %s824 = smul.addr %s823, 16
        %s825 = smul.addr %s824, 4
        %s826 = scalar_lea.vmem %s5, %s825
        %p827 = scmp.lt.s32.totalorder %s41, 7
        %s828 = scalar_select %p827, %s41, 7
        %s829 = scalar_lea.vmem %s10, %s828
        %p830 = scmp.lt.s32.totalorder %s41, 7
        %s831 = scalar_select %p830, %s41, 7
        %s832 = scalar_lea.vmem %s11, %s831
        %p833 = scmp.lt.s32.totalorder %s41, 7
        %s834 = scalar_select %p833, %s41, 7
        %s835 = scalar_lea.vmem %s12, %s834
        %p836 = scmp.lt.s32.totalorder %s41, 7
        %s837 = scalar_select %p836, %s41, 7
        %s838 = smul.addr %s837, 16
        %s839 = smul.addr %s838, 4
        %s840 = scalar_lea.vmem %s13, %s839
        %v842 = vld [vmem:[%s660] sm:$0xf]
        %v843 = vpack.c.bf16 %v842, %v842
        %v844 = vld [vmem:[%s815] sm:$0xf]
        %v845 = vld [vmem:[%s815 + $0x4] sm:$0xf]
        %v846 = vld [vmem:[%s815 + $0x8] sm:$0xf]
        %v847 = vld [vmem:[%s815 + $0xc] sm:$0xf]
        %v848 = vld [vmem:[%s815 + $0x10] sm:$0xf]
        %v849 = vld [vmem:[%s815 + $0x14] sm:$0xf]
        %v850 = vld [vmem:[%s815 + $0x18] sm:$0xf]
        %v851 = vld [vmem:[%s815 + $0x1c] sm:$0xf]
        %v852 = vld [vmem:[%s818] sm:$0x1]
        %v854 = vlaneseq
        %v855 = vshrl.u32 %v854, 7
        %v856 = vsub.s32 0, %v855
        %v857 = vrot.slane %v852, %v856
        %v867 = vunpack.c.l.b16 %v844
        %v868 = vunpack.c.l.b16 %v845
        %v869 = vunpack.c.l.b16 %v846
        %v870 = vunpack.c.l.b16 %v847
        %v871 = vunpack.c.l.b16 %v848
        %v872 = vunpack.c.l.b16 %v849
        %v873 = vunpack.c.l.b16 %v850
        %v874 = vunpack.c.l.b16 %v851
        %v875 = vpack.c.b16 %v868, %v867
        %v876 = vpack.c.b16 %v870, %v869
        %v877 = vpack.c.b16 %v872, %v871
        %v878 = vpack.c.b16 %v874, %v873
        %vm883 = vcmask 523264
        %v885 = vsel %vm883, %v843, 0
        %887 = vmatprep.subr.bf16.mxu0 0
        %888 = vmatpush1.bf16.msra.mxu0 %v875
        %889 = vmatprep.subr.bf16.mxu0 0
        %890 = vmatpush1.bf16.msra.mxu0 %v876
        %891 = vmatprep.subr.bf16.mxu0 0
        %892 = vmatpush1.bf16.msra.mxu0 %v877
        %893 = vmatprep.subr.bf16.mxu0 0
        %894 = vmatpush1.bf16.msra.mxu0 %v878
        %895 = vmatprep.subr.bf16.mxu0 0
        %896 = vmatpush1.bf16.msra.mxu0 0
        %897 = vmatprep.subr.bf16.mxu0 0
        %898 = vmatpush1.bf16.msra.mxu0 0
        %899 = vmatprep.subr.bf16.mxu0 0
        %900 = vmatpush1.bf16.msra.mxu0 0
        %901 = vmatprep.subr.bf16.mxu0 0
        %902 = vmatpush1.bf16.msra.mxu0 0
        %903 = vmatprep.subr.bf16.mxu0 0
        %904 = vmatpush1.bf16.msra.mxu0 0
        %905 = vmatprep.subr.bf16.mxu0 0
        %906 = vmatpush1.bf16.msra.mxu0 0
        %907 = vmatprep.subr.bf16.mxu0 0
        %908 = vmatpush1.bf16.msra.mxu0 0
        %909 = vmatprep.subr.bf16.mxu0 0
        %910 = vmatpush1.bf16.msra.mxu0 0
        %911 = vmatprep.subr.bf16.mxu0 0
        %912 = vmatpush1.bf16.msra.mxu0 0
        %913 = vmatprep.subr.bf16.mxu0 0
        %914 = vmatpush1.bf16.msra.mxu0 0
        %915 = vmatprep.subr.bf16.mxu0 0
        %916 = vmatpush1.bf16.msra.mxu0 0
        %917 = vmatprep.subr.bf16.mxu0 0
        %918 = vmatpush1.bf16.msra.mxu0 0
        %919 = vmatprep.mubr.bf16.mxu0 0
        %920 = vmatmul.mubr.bf16.gmra.mrb[0].mxu0 %v885
        %v921 = vpop.f32.mrb[0].mxu0
        %v922 = vadd.f32 %v857, %v921
        %v923 = vpop.f32.mrb[0].mxu0
        %v924 = vpop.f32.mrb[0].mxu0
        %v925 = vpop.f32.mrb[0].mxu0
        %926 = vdwg.mxu0
        %vm927 = vcmask 1043456
        %v928 = vsel %vm927, %v922, 0.0
        %929 = vadd.xlane.f32.xlu0 %v928
        %v930 = vpop.xlane.xlu0 %929
        %v931 = vrcp.pop 128.0
        %v932 = vmul.f32 %v930, %v931
        %v933 = vsub.f32 %v922, %v932
        %v934 = vmul.f32 %v933, %v933
        %v935 = vsel %vm927, %v934, 0.0
        %936 = vadd.xlane.f32.xlu0 %v935
        %v937 = vpop.xlane.xlu0 %936
        %v938 = vmul.f32 %v937, %v931
        %v939 = vadd.f32 %v938, 1e-05
        %v940 = vrsqrt.pop %v939
        %v941 = vmul.f32 %v933, %v940
        %v942 = vld [vmem:[%s821] sm:$0x1]
        %v944 = vlaneseq
        %v945 = vshrl.u32 %v944, 7
        %v946 = vsub.s32 0, %v945
        %v947 = vrot.slane %v942, %v946
        %v949 = vmul.f32 %v941, %v947
        %v950 = vld [vmem:[%s668] sm:$0x1]
        %v952 = vlaneseq
        %v953 = vshrl.u32 %v952, 7
        %v954 = vsub.s32 0, %v953
        %v955 = vrot.slane %v950, %v954
        %v957 = vadd.f32 %v949, %v955
        %vm958 = vcmp.ge.f32.partialorder %v957, 0.0
        %v959 = vmul.f32 %v957, 0.01
        %v960 = vsel %vm958, %v957, %v959
        %v961 = vpack.c.bf16 %v960, %v960
        %v962 = vld [vmem:[%s826] sm:$0xf]
        %v963 = vld [vmem:[%s826 + $0x4] sm:$0xf]
        %v964 = vld [vmem:[%s826 + $0x8] sm:$0xf]
        %v965 = vld [vmem:[%s826 + $0xc] sm:$0xf]
        %v966 = vld [vmem:[%s826 + $0x10] sm:$0xf]
        %v967 = vld [vmem:[%s826 + $0x14] sm:$0xf]
        %v968 = vld [vmem:[%s826 + $0x18] sm:$0xf]
        %v969 = vld [vmem:[%s826 + $0x1c] sm:$0xf]
        %v970 = vld [vmem:[%s826 + $0x20] sm:$0xf]
        %v971 = vld [vmem:[%s826 + $0x24] sm:$0xf]
        %v972 = vld [vmem:[%s826 + $0x28] sm:$0xf]
        %v973 = vld [vmem:[%s826 + $0x2c] sm:$0xf]
        %v974 = vld [vmem:[%s826 + $0x30] sm:$0xf]
        %v975 = vld [vmem:[%s826 + $0x34] sm:$0xf]
        %v976 = vld [vmem:[%s826 + $0x38] sm:$0xf]
        %v977 = vld [vmem:[%s826 + $0x3c] sm:$0xf]
        %v978 = vld [vmem:[%s676] sm:$0x1]
        %v980 = vlaneseq
        %v981 = vshrl.u32 %v980, 7
        %v982 = vsub.s32 0, %v981
        %v983 = vrot.slane %v978, %v982
        %v1001 = vunpack.c.l.b16 %v962
        %v1002 = vunpack.c.l.b16 %v963
        %v1003 = vunpack.c.l.b16 %v964
        %v1004 = vunpack.c.l.b16 %v965
        %v1005 = vunpack.c.l.b16 %v966
        %v1006 = vunpack.c.l.b16 %v967
        %v1007 = vunpack.c.l.b16 %v968
        %v1008 = vunpack.c.l.b16 %v969
        %v1009 = vunpack.c.l.b16 %v970
        %v1010 = vunpack.c.l.b16 %v971
        %v1011 = vunpack.c.l.b16 %v972
        %v1012 = vunpack.c.l.b16 %v973
        %v1013 = vunpack.c.l.b16 %v974
        %v1014 = vunpack.c.l.b16 %v975
        %v1015 = vunpack.c.l.b16 %v976
        %v1016 = vunpack.c.l.b16 %v977
        %v1017 = vpack.c.b16 %v1002, %v1001
        %v1018 = vpack.c.b16 %v1004, %v1003
        %v1019 = vpack.c.b16 %v1006, %v1005
        %v1020 = vpack.c.b16 %v1008, %v1007
        %v1021 = vpack.c.b16 %v1010, %v1009
        %v1022 = vpack.c.b16 %v1012, %v1011
        %v1023 = vpack.c.b16 %v1014, %v1013
        %v1024 = vpack.c.b16 %v1016, %v1015
        %1033 = vmatprep.subr.bf16.mxu0 0
        %1034 = vmatpush1.bf16.msra.mxu0 %v1017
        %1035 = vmatprep.subr.bf16.mxu0 0
        %1036 = vmatpush1.bf16.msra.mxu0 %v1018
        %1037 = vmatprep.subr.bf16.mxu0 0
        %1038 = vmatpush1.bf16.msra.mxu0 %v1019
        %1039 = vmatprep.subr.bf16.mxu0 0
        %1040 = vmatpush1.bf16.msra.mxu0 %v1020
        %1041 = vmatprep.subr.bf16.mxu0 0
        %1042 = vmatpush1.bf16.msra.mxu0 %v1021
        %1043 = vmatprep.subr.bf16.mxu0 0
        %1044 = vmatpush1.bf16.msra.mxu0 %v1022
        %1045 = vmatprep.subr.bf16.mxu0 0
        %1046 = vmatpush1.bf16.msra.mxu0 %v1023
        %1047 = vmatprep.subr.bf16.mxu0 0
        %1048 = vmatpush1.bf16.msra.mxu0 %v1024
        %1049 = vmatprep.subr.bf16.mxu0 0
        %1050 = vmatpush1.bf16.msra.mxu0 0
        %1051 = vmatprep.subr.bf16.mxu0 0
        %1052 = vmatpush1.bf16.msra.mxu0 0
        %1053 = vmatprep.subr.bf16.mxu0 0
        %1054 = vmatpush1.bf16.msra.mxu0 0
        %1055 = vmatprep.subr.bf16.mxu0 0
        %1056 = vmatpush1.bf16.msra.mxu0 0
        %1057 = vmatprep.subr.bf16.mxu0 0
        %1058 = vmatpush1.bf16.msra.mxu0 0
        %1059 = vmatprep.subr.bf16.mxu0 0
        %1060 = vmatpush1.bf16.msra.mxu0 0
        %1061 = vmatprep.subr.bf16.mxu0 0
        %1062 = vmatpush1.bf16.msra.mxu0 0
        %1063 = vmatprep.subr.bf16.mxu0 0
        %1064 = vmatpush1.bf16.msra.mxu0 0
        %1065 = vmatprep.mubr.bf16.mxu0 0
        %1066 = vmatmul.mubr.bf16.gmra.mrb[0].mxu0 %v961
        %v1067 = vpop.f32.mrb[0].mxu0
        %v1068 = vadd.f32 %v983, %v1067
        %v1069 = vpop.f32.mrb[0].mxu0
        %v1070 = vpop.f32.mrb[0].mxu0
        %v1071 = vpop.f32.mrb[0].mxu0
        %1072 = vdwg.mxu0
        %v1073 = vsel %vm927, %v1068, 0.0
        %1074 = vadd.xlane.f32.xlu0 %v1073
        %v1075 = vpop.xlane.xlu0 %1074
        %v1076 = vmul.f32 %v1075, %v931
        %v1077 = vsub.f32 %v1068, %v1076
        %v1078 = vmul.f32 %v1077, %v1077
        %v1079 = vsel %vm927, %v1078, 0.0
        %1080 = vadd.xlane.f32.xlu0 %v1079
        %v1081 = vpop.xlane.xlu0 %1080
        %v1082 = vmul.f32 %v1081, %v931
        %v1083 = vadd.f32 %v1082, 1e-05
        %v1084 = vrsqrt.pop %v1083
        %v1085 = vmul.f32 %v1077, %v1084
        %v1086 = vld [vmem:[%s684] sm:$0x1]
        %v1088 = vlaneseq
        %v1089 = vshrl.u32 %v1088, 7
        %v1090 = vsub.s32 0, %v1089
        %v1091 = vrot.slane %v1086, %v1090
        %v1093 = vmul.f32 %v1085, %v1091
        %v1094 = vld [vmem:[%s692] sm:$0x1]
        %v1096 = vlaneseq
        %v1097 = vshrl.u32 %v1096, 7
        %v1098 = vsub.s32 0, %v1097
        %v1099 = vrot.slane %v1094, %v1098
        %v1101 = vadd.f32 %v1093, %v1099
        %vm1102 = vcmp.ge.f32.partialorder %v1101, 0.0
        %v1103 = vmul.f32 %v1101, 0.01
        %v1104 = vsel %vm1102, %v1101, %v1103
        %v1105 = vpack.c.bf16 %v1104, %v1104
        %v1106 = vld [vmem:[%s701] sm:$0xf]
        %v1107 = vld [vmem:[%s701 + $0x4] sm:$0xf]
        %v1108 = vld [vmem:[%s701 + $0x8] sm:$0xf]
        %v1109 = vld [vmem:[%s701 + $0xc] sm:$0xf]
        %v1110 = vld [vmem:[%s701 + $0x10] sm:$0xf]
        %v1111 = vld [vmem:[%s701 + $0x14] sm:$0xf]
        %v1112 = vld [vmem:[%s701 + $0x18] sm:$0xf]
        %v1113 = vld [vmem:[%s701 + $0x1c] sm:$0xf]
        %v1114 = vld [vmem:[%s701 + $0x20] sm:$0xf]
        %v1115 = vld [vmem:[%s701 + $0x24] sm:$0xf]
        %v1116 = vld [vmem:[%s701 + $0x28] sm:$0xf]
        %v1117 = vld [vmem:[%s701 + $0x2c] sm:$0xf]
        %v1118 = vld [vmem:[%s701 + $0x30] sm:$0xf]
        %v1119 = vld [vmem:[%s701 + $0x34] sm:$0xf]
        %v1120 = vld [vmem:[%s701 + $0x38] sm:$0xf]
        %v1121 = vld [vmem:[%s701 + $0x3c] sm:$0xf]
        %v1122 = vld [vmem:[%s829] sm:$0x1]
        %v1124 = vlaneseq
        %v1125 = vshrl.u32 %v1124, 7
        %v1126 = vsub.s32 0, %v1125
        %v1127 = vrot.slane %v1122, %v1126
        %v1145 = vunpack.c.l.b16 %v1106
        %v1146 = vunpack.c.l.b16 %v1107
        %v1147 = vunpack.c.l.b16 %v1108
        %v1148 = vunpack.c.l.b16 %v1109
        %v1149 = vunpack.c.l.b16 %v1110
        %v1150 = vunpack.c.l.b16 %v1111
        %v1151 = vunpack.c.l.b16 %v1112
        %v1152 = vunpack.c.l.b16 %v1113
        %v1153 = vunpack.c.l.b16 %v1114
        %v1154 = vunpack.c.l.b16 %v1115
        %v1155 = vunpack.c.l.b16 %v1116
        %v1156 = vunpack.c.l.b16 %v1117
        %v1157 = vunpack.c.l.b16 %v1118
        %v1158 = vunpack.c.l.b16 %v1119
        %v1159 = vunpack.c.l.b16 %v1120
        %v1160 = vunpack.c.l.b16 %v1121
        %v1161 = vpack.c.b16 %v1146, %v1145
        %v1162 = vpack.c.b16 %v1148, %v1147
        %v1163 = vpack.c.b16 %v1150, %v1149
        %v1164 = vpack.c.b16 %v1152, %v1151
        %v1165 = vpack.c.b16 %v1154, %v1153
        %v1166 = vpack.c.b16 %v1156, %v1155
        %v1167 = vpack.c.b16 %v1158, %v1157
        %v1168 = vpack.c.b16 %v1160, %v1159
        %1177 = vmatprep.subr.bf16.mxu0 0
        %1178 = vmatpush1.bf16.msra.mxu0 %v1161
        %1179 = vmatprep.subr.bf16.mxu0 0
        %1180 = vmatpush1.bf16.msra.mxu0 %v1162
        %1181 = vmatprep.subr.bf16.mxu0 0
        %1182 = vmatpush1.bf16.msra.mxu0 %v1163
        %1183 = vmatprep.subr.bf16.mxu0 0
        %1184 = vmatpush1.bf16.msra.mxu0 %v1164
        %1185 = vmatprep.subr.bf16.mxu0 0
        %1186 = vmatpush1.bf16.msra.mxu0 %v1165
        %1187 = vmatprep.subr.bf16.mxu0 0
        %1188 = vmatpush1.bf16.msra.mxu0 %v1166
        %1189 = vmatprep.subr.bf16.mxu0 0
        %1190 = vmatpush1.bf16.msra.mxu0 %v1167
        %1191 = vmatprep.subr.bf16.mxu0 0
        %1192 = vmatpush1.bf16.msra.mxu0 %v1168
        %1193 = vmatprep.subr.bf16.mxu0 0
        %1194 = vmatpush1.bf16.msra.mxu0 0
        %1195 = vmatprep.subr.bf16.mxu0 0
        %1196 = vmatpush1.bf16.msra.mxu0 0
        %1197 = vmatprep.subr.bf16.mxu0 0
        %1198 = vmatpush1.bf16.msra.mxu0 0
        %1199 = vmatprep.subr.bf16.mxu0 0
        %1200 = vmatpush1.bf16.msra.mxu0 0
        %1201 = vmatprep.subr.bf16.mxu0 0
        %1202 = vmatpush1.bf16.msra.mxu0 0
        %1203 = vmatprep.subr.bf16.mxu0 0
        %1204 = vmatpush1.bf16.msra.mxu0 0
        %1205 = vmatprep.subr.bf16.mxu0 0
        %1206 = vmatpush1.bf16.msra.mxu0 0
        %1207 = vmatprep.subr.bf16.mxu0 0
        %1208 = vmatpush1.bf16.msra.mxu0 0
        %1209 = vmatprep.mubr.bf16.mxu0 0
        %1210 = vmatmul.mubr.bf16.gmra.mrb[0].mxu0 %v1105
        %v1211 = vpop.f32.mrb[0].mxu0
        %v1212 = vadd.f32 %v1127, %v1211
        %v1213 = vpop.f32.mrb[0].mxu0
        %v1214 = vpop.f32.mrb[0].mxu0
        %v1215 = vpop.f32.mrb[0].mxu0
        %1216 = vdwg.mxu0
        %v1217 = vsel %vm927, %v1212, 0.0
        %1218 = vadd.xlane.f32.xlu0 %v1217
        %v1219 = vpop.xlane.xlu0 %1218
        %v1220 = vmul.f32 %v1219, %v931
        %v1221 = vsub.f32 %v1212, %v1220
        %v1222 = vmul.f32 %v1221, %v1221
        %v1223 = vsel %vm927, %v1222, 0.0
        %1224 = vadd.xlane.f32.xlu0 %v1223
        %v1225 = vpop.xlane.xlu0 %1224
        %v1226 = vmul.f32 %v1225, %v931
        %v1227 = vadd.f32 %v1226, 1e-05
        %v1228 = vrsqrt.pop %v1227
        %v1229 = vmul.f32 %v1221, %v1228
        %v1230 = vld [vmem:[%s832] sm:$0x1]
        %v1232 = vlaneseq
        %v1233 = vshrl.u32 %v1232, 7
        %v1234 = vsub.s32 0, %v1233
        %v1235 = vrot.slane %v1230, %v1234
        %v1237 = vmul.f32 %v1229, %v1235
        %v1238 = vld [vmem:[%s835] sm:$0x1]
        %v1240 = vlaneseq
        %v1241 = vshrl.u32 %v1240, 7
        %v1242 = vsub.s32 0, %v1241
        %v1243 = vrot.slane %v1238, %v1242
        %v1245 = vadd.f32 %v1237, %v1243
        %vm1246 = vcmp.ge.f32.partialorder %v1245, 0.0
        %v1247 = vmul.f32 %v1245, 0.01
        %v1248 = vsel %vm1246, %v1245, %v1247
        %v1249 = vpack.c.bf16 %v1248, %v1248
        %v1250 = vld [vmem:[%s840] sm:$0xf]
        %v1251 = vld [vmem:[%s840 + $0x4] sm:$0xf]
        %v1252 = vld [vmem:[%s840 + $0x8] sm:$0xf]
        %v1253 = vld [vmem:[%s840 + $0xc] sm:$0xf]
        %v1254 = vld [vmem:[%s840 + $0x10] sm:$0xf]
        %v1255 = vld [vmem:[%s840 + $0x14] sm:$0xf]
        %v1256 = vld [vmem:[%s840 + $0x18] sm:$0xf]
        %v1257 = vld [vmem:[%s840 + $0x1c] sm:$0xf]
        %v1258 = vld [vmem:[%s840 + $0x20] sm:$0xf]
        %v1259 = vld [vmem:[%s840 + $0x24] sm:$0xf]
        %v1260 = vld [vmem:[%s840 + $0x28] sm:$0xf]
        %v1261 = vld [vmem:[%s840 + $0x2c] sm:$0xf]
        %v1262 = vld [vmem:[%s840 + $0x30] sm:$0xf]
        %v1263 = vld [vmem:[%s840 + $0x34] sm:$0xf]
        %v1264 = vld [vmem:[%s840 + $0x38] sm:$0xf]
        %v1265 = vld [vmem:[%s840 + $0x3c] sm:$0xf]
        %v1266 = vld [vmem:[%s709] sm:$0x1]
        %v1268 = vlaneseq
        %v1269 = vshrl.u32 %v1268, 7
        %v1270 = vsub.s32 0, %v1269
        %v1271 = vrot.slane %v1266, %v1270
        %v1289 = vunpack.c.l.b16 %v1250
        %v1290 = vunpack.c.l.b16 %v1251
        %v1291 = vunpack.c.l.b16 %v1252
        %v1292 = vunpack.c.l.b16 %v1253
        %v1293 = vunpack.c.l.b16 %v1254
        %v1294 = vunpack.c.l.b16 %v1255
        %v1295 = vunpack.c.l.b16 %v1256
        %v1296 = vunpack.c.l.b16 %v1257
        %v1297 = vunpack.c.l.b16 %v1258
        %v1298 = vunpack.c.l.b16 %v1259
        %v1299 = vunpack.c.l.b16 %v1260
        %v1300 = vunpack.c.l.b16 %v1261
        %v1301 = vunpack.c.l.b16 %v1262
        %v1302 = vunpack.c.l.b16 %v1263
        %v1303 = vunpack.c.l.b16 %v1264
        %v1304 = vunpack.c.l.b16 %v1265
        %v1305 = vpack.c.b16 %v1290, %v1289
        %v1306 = vpack.c.b16 %v1292, %v1291
        %v1307 = vpack.c.b16 %v1294, %v1293
        %v1308 = vpack.c.b16 %v1296, %v1295
        %v1309 = vpack.c.b16 %v1298, %v1297
        %v1310 = vpack.c.b16 %v1300, %v1299
        %v1311 = vpack.c.b16 %v1302, %v1301
        %v1312 = vpack.c.b16 %v1304, %v1303
        %1321 = vmatprep.subr.bf16.mxu0 0
        %1322 = vmatpush1.bf16.msra.mxu0 %v1305
        %1323 = vmatprep.subr.bf16.mxu0 0
        %1324 = vmatpush1.bf16.msra.mxu0 %v1306
        %1325 = vmatprep.subr.bf16.mxu0 0
        %1326 = vmatpush1.bf16.msra.mxu0 %v1307
        %1327 = vmatprep.subr.bf16.mxu0 0
        %1328 = vmatpush1.bf16.msra.mxu0 %v1308
        %1329 = vmatprep.subr.bf16.mxu0 0
        %1330 = vmatpush1.bf16.msra.mxu0 %v1309
        %1331 = vmatprep.subr.bf16.mxu0 0
        %1332 = vmatpush1.bf16.msra.mxu0 %v1310
        %1333 = vmatprep.subr.bf16.mxu0 0
        %1334 = vmatpush1.bf16.msra.mxu0 %v1311
        %1335 = vmatprep.subr.bf16.mxu0 0
        %1336 = vmatpush1.bf16.msra.mxu0 %v1312
        %1337 = vmatprep.subr.bf16.mxu0 0
        %1338 = vmatpush1.bf16.msra.mxu0 0
        %1339 = vmatprep.subr.bf16.mxu0 0
        %1340 = vmatpush1.bf16.msra.mxu0 0
        %1341 = vmatprep.subr.bf16.mxu0 0
        %1342 = vmatpush1.bf16.msra.mxu0 0
        %1343 = vmatprep.subr.bf16.mxu0 0
        %1344 = vmatpush1.bf16.msra.mxu0 0
        %1345 = vmatprep.subr.bf16.mxu0 0
        %1346 = vmatpush1.bf16.msra.mxu0 0
        %1347 = vmatprep.subr.bf16.mxu0 0
        %1348 = vmatpush1.bf16.msra.mxu0 0
        %1349 = vmatprep.subr.bf16.mxu0 0
        %1350 = vmatpush1.bf16.msra.mxu0 0
        %1351 = vmatprep.subr.bf16.mxu0 0
        %1352 = vmatpush1.bf16.msra.mxu0 0
        %1353 = vmatprep.mubr.bf16.mxu0 0
        %1354 = vmatmul.mubr.bf16.gmra.mrb[0].mxu0 %v1249
        %v1355 = vpop.f32.mrb[0].mxu0
        %v1356 = vadd.f32 %v1271, %v1355
        %v1357 = vpop.f32.mrb[0].mxu0
        %v1358 = vpop.f32.mrb[0].mxu0
        %v1359 = vpop.f32.mrb[0].mxu0
        %1360 = vdwg.mxu0
        %vm1361 = vcmask 519168
        %1362 = vst.msk [vmem:[%s810] sm:$0xf] %vm1361, %v1356
        %s1363 = sand.u32 %s439, 1
        %s1364 = scalar_lea.sflag [#allocation4], %s1363
        %s1365 = sand.u32 %s439, 1
        %s1366 = smul.addr %s1365, 4
        %s1367 = scalar_lea.vmem [#allocation14], %s1366
        // Predicated region
        $region109: #{tpu_custom_call.1} parent=79 // pred_check
          %p1368 = pneg %p449
        $region110: #{tpu_custom_call.1} parent=79 // pred_check_branch
          %1370 = sbr.rel (%p1368) target = $region112
        $region111: #{tpu_custom_call.1} parent=79 // pred_region
          %s1372 = ssub.s32 64, 64
          %1373 = vsyncadd %s1364, %s1372
          %s1374 = smul.addr %s41, 64
          %s1375 = scalar_lea.hbm %s15, %s1374
          %s1377 = sshll.u32 %s1367, 4
          %s1378 = int_to_ptr.vmem [resolvable:$true] %s1377
          %1380 = dma.vmem_to_hbm [thread:$0]  %s1378, 64, %s1375, %s1364
        $region112: #{tpu_custom_call.1} parent=79 // pred_fallthru
          _
      $region80: #{tpu_custom_call.1} parent=5 // pred_fallthru
        _
      %p1381 = scmp.le.s32.totalorder 2, %s36
      // Predicated region
      $region113: #{tpu_custom_call.1} parent=5 // pred_check
        %p1382 = pneg %p1381
      $region114: #{tpu_custom_call.1} parent=5 // pred_check_branch
        %1384 = sbr.rel (%p1382) target = $region116
      $region115: #{tpu_custom_call.1} parent=5 // pred_region
        %s1385 = ssub.s32 %s36, 2
        // Predicated region
        $region117: #{tpu_custom_call.1} parent=115 // pred_check
          %p1386 = pneg %p455
        $region118: #{tpu_custom_call.1} parent=115 // pred_check_branch
          %1388 = sbr.rel (%p1386) target = $region120
        $region119: #{tpu_custom_call.1} parent=115 // pred_region
          %s1389 = sand.u32 %s440, 1
          %s1390 = scalar_lea.sflag [#allocation4], %s1389
          %s1391 = sand.u32 %s440, 1
          %s1392 = smul.addr %s1391, 4
          %s1393 = scalar_lea.vmem [#allocation14], %s1392
          %1394 = dma.done %s1390, 64
        $region120: #{tpu_custom_call.1} parent=115 // pred_fallthru
          _
      $region116: #{tpu_custom_call.1} parent=5 // pred_fallthru
        _
    $region6: #{tpu_custom_call.1} parent=1 // loop_footer
      %s40 = sadd.s32 1, %s36
    $region7: #{tpu_custom_call.1} parent=1 // loop_footer_branch
      %35 = sbr.rel target = $region3
    $region8: #{tpu_custom_call.1} parent=1 // loop_exit
      _
    %1395 = vsyncpa [#allocation3], 1
    %s1396 = scalar_lea.sflag [#allocation3], 1
    %1397 = vsyncpa %s1396, 1
    %1398 = vsyncpa [#allocation6], 1
    %s1399 = scalar_lea.sflag [#allocation6], 1
    %1400 = vsyncpa %s1399, 1
    %1401 = vsyncpa [#allocation9], 1
    %s1402 = scalar_lea.sflag [#allocation9], 1
    %1403 = vsyncpa %s1402, 1
    %1404 = vsyncpa [#allocation12], 1
    %s1405 = scalar_lea.sflag [#allocation12], 1
    %1406 = vsyncpa %s1405, 1
    %1407 = vsyncpa [#allocation4], 1
    %s1408 = scalar_lea.sflag [#allocation4], 1
    %1409 = vsyncpa %s1408, 1

</llo_original>
